<compile_context>
chip_gen: v6e
topology: v6e:2x2x1
jax: 0.10.0
libtpu: 0.0.40
codegen_flags: <defaults>
</compile_context>

<pallas_src>
import functools

import jax
import jax.numpy as jnp
import numpy as np
from jax.experimental import pallas as pl
from jax.experimental.pallas import tpu as pltpu

BN_EPS = 1e-5
LANES = 128
CONV_K_TILE = 2304          # split K = 9*Cin over a reduction axis above this


def _chip_defaults():
    """Per-generation tile caps and scoped-VMEM limit."""
    try:
        vmem = int(getattr(pltpu.get_tpu_info(), "vmem_capacity_bytes", 0))
    except Exception:
        vmem = 0
    if vmem >= 100 * 1024 * 1024:
        # v5e / v6e / v5p class: 128 MiB VMEM, single TensorCore.
        return dict(conv_row_tile=512, ew_row_tile=8192, proj_row_tile=1024,
                    vmem_limit=96 * 1024 * 1024, prefer_two_blocks=False)
    if vmem > 0:
        # v7x class: 64 MiB VMEM per TensorCore, 2 TensorCores per chip.
        return dict(conv_row_tile=256, ew_row_tile=4096, proj_row_tile=512,
                    vmem_limit=48 * 1024 * 1024, prefer_two_blocks=True)
    # Unknown chip / no query available: conservative settings that compile anywhere.
    return dict(conv_row_tile=256, ew_row_tile=4096, proj_row_tile=512,
                vmem_limit=32 * 1024 * 1024, prefer_two_blocks=False)


_CFG = _chip_defaults()


def _cparams(semantics):
    return pltpu.CompilerParams(dimension_semantics=semantics,
                                vmem_limit_bytes=_CFG["vmem_limit"])


# --------------------------------------------------------------------------
# Kernels
# --------------------------------------------------------------------------
def _conv_stats_kernel(p_ref, w_ref, o_ref, stats_ref, acc_ref):
    """K-tiled im2col conv tile + fused per-M-tile BN partial statistics.

    grid = (M tiles [parallel], K tiles [arbitrary / reduction])
    p_ref:     (TM, TK)   patch rows, pre-cast to compute dtype
    w_ref:     (TK, C)    reshaped conv weights, compute dtype
    o_ref:     (TM, C)    conv output tile (storage dtype, e.g. bf16)
    stats_ref: (1, 2, C)  per-M-tile [sum, sum-of-squares] over rows (f32)
    acc_ref:   (TM, C)    f32 accumulator scratch
    """
    k = pl.program_id(1)

    @pl.when(k == 0)
    def _():
        acc_ref[...] = jnp.zeros_like(acc_ref)

    acc_ref[...] += jnp.dot(p_ref[...], w_ref[...],
                            preferred_element_type=jnp.float32)

    @pl.when(k == pl.num_programs(1) - 1)
    def _():
        y = acc_ref[...]                       # stats from the f32 accumulator,
        o_ref[...] = y.astype(o_ref.dtype)     # NOT from the (possibly bf16) store
        stats_ref[0, 0:1, :] = jnp.sum(y, axis=0, keepdims=True)
        stats_ref[0, 1:2, :] = jnp.sum(y * y, axis=0, keepdims=True)


def _scale_shift_relu_kernel(y_ref, s_ref, b_ref, o_ref):
    """relu(y * scale + shift) — BN-apply, layout agnostic (lane-dense capable)."""
    o_ref[...] = jnp.maximum(
        y_ref[...].astype(jnp.float32) * s_ref[...] + b_ref[...], 0.0
    ).astype(o_ref.dtype)


def _scale_shift_add_relu_kernel(y_ref, r_ref, s_ref, b_ref, o_ref):
    """relu(y * scale + shift + residual) — identity-shortcut epilogue."""
    o_ref[...] = jnp.maximum(
        y_ref[...].astype(jnp.float32) * s_ref[...] + b_ref[...]
        + r_ref[...].astype(jnp.float32), 0.0
    ).astype(o_ref.dtype)


def _proj_add_relu_kernel(y_ref, xs_ref, w3_ref, b3_ref, s_ref, b_ref, o_ref):
    """relu(y * scale + shift + (xs @ w3 + b3)) — fused 1x1-projection shortcut."""
    sc = jnp.dot(xs_ref[...], w3_ref[...],
                 preferred_element_type=jnp.float32) + b3_ref[...]
    o_ref[...] = jnp.maximum(
        y_ref[...].astype(jnp.float32) * s_ref[...] + b_ref[...] + sc, 0.0
    ).astype(o_ref.dtype)


# --------------------------------------------------------------------------
# Tiling helpers
# --------------------------------------------------------------------------
def _round_up(x, m):
    return ((x + m - 1) // m) * m


def _row_tiling(m, cap, prefer_split=False):
    """Pick (tile, grid, padded_rows) for tiling `m` rows.

    Prefers a tile (multiple of 16 sublanes) that divides m exactly so no
    jnp.pad full-array HBM copy is needed; falls back to padding otherwise.
    prefer_split (v7x) forces grid >= 2 when cheap so both TensorCores work.
    """
    sub = 16
    if m <= cap:
        if prefer_split and m >= 4 * sub and m % (2 * sub) == 0:
            return m // 2, 2, m
        return m, 1, m
    upper = (cap // sub) * sub
    for t in range(upper, sub - 1, -sub):
        if m % t == 0:
            return t, m // t, m
    mp = _round_up(m, cap)
    return cap, mp // cap, mp


def _k_tiling(k, cap):
    """Split the conv reduction dim K into 128-multiples when K is large."""
    if k <= cap:
        return k, 1
    upper = (cap // 128) * 128
    for t in range(upper, 127, -128):
        if k % t == 0:
            return t, k // t
    return k, 1     # no aligned divisor: keep a single (large) K block


def _pad_rows(a, mp):
    m = a.shape[0]
    if mp == m:
        return a
    return jnp.pad(a, ((0, mp - m),) + ((0, 0),) * (a.ndim - 1))


# --------------------------------------------------------------------------
# Pallas-call wrappers
# --------------------------------------------------------------------------
def _im2col_3x3(x_nhwc, stride):
    """(N,H,W,Cin) -> (N*Ho*Wo, 9*Cin) patch matrix for a 3x3 / pad-1 conv.

    Operates in the dtype of x (compute dtype), so patch HBM traffic is
    already halved on the bf16 path.  Stride is applied here.
    """
    N, H, W, Cin = x_nhwc.shape
    Ho = (H - 1) // stride + 1
    Wo = (W - 1) // stride + 1
    xp = jnp.pad(x_nhwc, ((0, 0), (1, 1), (1, 1), (0, 0)))
    taps = []
    for kh in range(3):
        for kw in range(3):
            taps.append(xp[:, kh:kh + 1 + stride * (Ho - 1):stride,
                           kw:kw + 1 + stride * (Wo - 1):stride, :])
    patches = jnp.concatenate(taps, axis=-1)            # (N, Ho, Wo, 9*Cin)
    return patches.reshape(N * Ho * Wo, 9 * Cin), (N, Ho, Wo)


def _conv_bn_stats(patches, w2d, out_dtype):
    """Tiled im2col matmul (split-K reduction) with fused per-tile BN stats."""
    m_true, K = patches.shape
    C = w2d.shape[1]
    tm, gm, mp = _row_tiling(m_true, _CFG["conv_row_tile"],
                             prefer_split=_CFG["prefer_two_blocks"])
    tk, gk = _k_tiling(K, CONV_K_TILE)
    p = _pad_rows(patches, mp)              # zero rows contribute 0 to stats
    y, stats = pl.pallas_call(
        _conv_stats_kernel,
        out_shape=(jax.ShapeDtypeStruct((mp, C), out_dtype),
                   jax.ShapeDtypeStruct((gm, 2, C), jnp.float32)),
        grid=(gm, gk),
        in_specs=[pl.BlockSpec((tm, tk), lambda i, k: (i, k)),
                  pl.BlockSpec((tk, C), lambda i, k: (k, 0))],
        out_specs=(pl.BlockSpec((tm, C), lambda i, k: (i, 0)),
                   pl.BlockSpec((1, 2, C), lambda i, k: (i, 0, 0))),
        scratch_shapes=[pltpu.VMEM((tm, C), jnp.float32)],
        compiler_params=_cparams(("parallel", "arbitrary")),
    )(p, w2d)
    # O(C)-sized finalization of the split reduction (plain JAX, negligible).
    tot = jnp.sum(stats, axis=0)                          # (2, C)
    mean = tot[0] / m_true
    # E[x^2]-E[x]^2 in f32; clamp to guard against cancellation going negative.
    var = jnp.maximum(tot[1] / m_true - mean * mean, 0.0)
    return y[:m_true], mean, var


def _bn_affine(mean, var, gamma, beta):
    inv = jax.lax.rsqrt(var + BN_EPS)
    scale = gamma * inv
    shift = beta - mean * scale
    return scale, shift


def _ew_call(kernel, row_arrays, vec_arrays, out_dtype):
    """Tiled elementwise pallas_call over (rows, width) slabs."""
    rows, width = row_arrays[0].shape
    tm, g, mp = _row_tiling(rows, _CFG["ew_row_tile"])
    row_arrays = [_pad_rows(a, mp) for a in row_arrays]
    row_spec = pl.BlockSpec((tm, width), lambda i: (i, 0))
    vec_spec = pl.BlockSpec((1, width), lambda i: (0, 0))
    out = pl.pallas_call(
        kernel,
        out_shape=jax.ShapeDtypeStruct((mp, width), out_dtype),
        grid=(g,),
        in_specs=[row_spec] * len(row_arrays) + [vec_spec] * len(vec_arrays),
        out_specs=row_spec,
        compiler_params=_cparams(("parallel",)),
    )(*row_arrays, *vec_arrays)
    return out[:rows]


def _lane_dense_ok(m, c):
    return (m * c) % LANES == 0 and LANES % c == 0


def _bn_relu_apply(y2d, scale, shift, out_dtype):
    """relu(bn_apply(y)) — lane-dense (rows, 128) layout when channels divide 128."""
    M, C = y2d.shape
    if _lane_dense_ok(M, C):
        rows, rep = (M * C) // LANES, LANES // C
        out = _ew_call(_scale_shift_relu_kernel,
                       [y2d.reshape(rows, LANES)],
                       [jnp.tile(scale.reshape(1, C), (1, rep)),
                        jnp.tile(shift.reshape(1, C), (1, rep))],
                       out_dtype)
        return out.reshape(M, C)
    return _ew_call(_scale_shift_relu_kernel, [y2d],
                    [scale.reshape(1, C), shift.reshape(1, C)], out_dtype)


def _bn_add_relu(y2d, res2d, scale, shift):
    """relu(bn_apply(y) + residual) — identity shortcut, lane-dense when possible."""
    M, C = y2d.shape
    if _lane_dense_ok(M, C):
        rows, rep = (M * C) // LANES, LANES // C
        out = _ew_call(_scale_shift_add_relu_kernel,
                       [y2d.reshape(rows, LANES), res2d.reshape(rows, LANES)],
                       [jnp.tile(scale.reshape(1, C), (1, rep)),
                        jnp.tile(shift.reshape(1, C), (1, rep))],
                       jnp.float32)
        return out.reshape(M, C)
    return _ew_call(_scale_shift_add_relu_kernel, [y2d, res2d],
                    [scale.reshape(1, C), shift.reshape(1, C)], jnp.float32)


def _bn_proj_add_relu(y2d, xs2d, w3, b3, scale, shift):
    """relu(bn_apply(y) + conv1x1(x)) — shortcut projection fused into epilogue."""
    M, C = y2d.shape
    Cin = xs2d.shape[1]
    tm, g, mp = _row_tiling(M, _CFG["proj_row_tile"],
                            prefer_split=_CFG["prefer_two_blocks"])
    y = _pad_rows(y2d, mp)
    xs = _pad_rows(xs2d, mp)
    row_y = pl.BlockSpec((tm, C), lambda i: (i, 0))
    row_x = pl.BlockSpec((tm, Cin), lambda i: (i, 0))
    vec_c = pl.BlockSpec((1, C), lambda i: (0, 0))
    out = pl.pallas_call(
        _proj_add_relu_kernel,
        out_shape=jax.ShapeDtypeStruct((mp, C), jnp.float32),
        grid=(g,),
        in_specs=[row_y, row_x,
                  pl.BlockSpec((Cin, C), lambda i: (0, 0)),
                  vec_c, vec_c, vec_c],
        out_specs=row_y,
        compiler_params=_cparams(("parallel",)),
    )(y, xs, w3, b3.reshape(1, C), scale.reshape(1, C), shift.reshape(1, C))
    return out[:M]


# --------------------------------------------------------------------------
# Residual block: parameters + forward
# --------------------------------------------------------------------------
def init_residual_params(key, input_channels, num_channels, use_1x1conv=False):
    ks = jax.random.split(key, 6)

    def conv_init(k, kh, kw, cin, cout):
        fan_in = cin * kh * kw
        bound = 1.0 / float(np.sqrt(fan_in))
        return jax.random.uniform(k, (kh, kw, cin, cout), jnp.float32, -bound, bound)

    params = {
        "w1": conv_init(ks[0], 3, 3, input_channels, num_channels),   # HWIO
        # b1/b2 are kept for module parity but are mathematically cancelled by
        # the training-mode BatchNorm that follows each conv, so the kernels
        # never apply them.
        "b1": 0.1 * jax.random.uniform(ks[1], (num_channels,), jnp.float32, -1.0, 1.0),
        "w2": conv_init(ks[2], 3, 3, num_channels, num_channels),
        "b2": 0.1 * jax.random.uniform(ks[3], (num_channels,), jnp.float32, -1.0, 1.0),
        "bn1_gamma": jnp.ones((num_channels,), jnp.float32),
        "bn1_beta": jnp.zeros((num_channels,), jnp.float32),
        "bn2_gamma": jnp.ones((num_channels,), jnp.float32),
        "bn2_beta": jnp.zeros((num_channels,), jnp.float32),
    }
    if use_1x1conv:
        params["w3"] = conv_init(ks[4], 1, 1, input_channels, num_channels).reshape(
            input_channels, num_channels)
        params["b3"] = 0.1 * jax.random.uniform(ks[5], (num_channels,), jnp.float32, -1.0, 1.0)
    return params


@functools.partial(jax.jit, static_argnames=("strides", "compute_dtype"))
def residual_forward(params, x_nchw, *, strides=1, compute_dtype=jnp.bfloat16):
    """Residual block forward.  compute_dtype=bf16 is the fast path (operands
    AND intermediates stored bf16, f32 accumulation); jnp.float32 is exact."""
    # NCHW (PyTorch) -> NHWC (channels on the 128-lane axis)
    x = jnp.transpose(x_nchw, (0, 2, 3, 1)).astype(jnp.float32)
    Cin = x.shape[-1]
    C = params["w1"].shape[-1]
    cd = compute_dtype

    # conv1 (3x3, stride) + fused BN1 batch statistics.  Operands pre-cast.
    p1, (N, Ho, Wo) = _im2col_3x3(x.astype(cd), strides)
    m1 = N * Ho * Wo
    y1, mean1, var1 = _conv_bn_stats(p1, params["w1"].reshape(9 * Cin, C).astype(cd), cd)
    sc1, sh1 = _bn_affine(mean1, var1, params["bn1_gamma"], params["bn1_beta"])
    h = _bn_relu_apply(y1, sc1, sh1, cd)                              # (m1, C) in cd

    # conv2 (3x3, stride 1) + fused BN2 batch statistics.
    p2, _ = _im2col_3x3(h.reshape(N, Ho, Wo, C), 1)
    y2, mean2, var2 = _conv_bn_stats(p2, params["w2"].reshape(9 * C, C).astype(cd), cd)
    sc2, sh2 = _bn_affine(mean2, var2, params["bn2_gamma"], params["bn2_beta"])

    # shortcut + BN2-apply + add + relu fused into one pass (final output f32).
    if "w3" in params:
        xs = x[:, ::strides, ::strides, :].reshape(m1, Cin).astype(cd)
        out2d = _bn_proj_add_relu(y2, xs, params["w3"].astype(cd), params["b3"],
                                  sc2, sh2)
    else:
        if strides != 1 or Cin != C:
            raise ValueError(
                "identity shortcut requires strides == 1 and input_channels == "
                "num_channels; use use_1x1conv=True otherwise")
        out2d = _bn_add_relu(y2, x.reshape(m1, C), sc2, sh2)

    out = out2d.reshape(N, Ho, Wo, C)
    return jnp.transpose(out, (0, 3, 1, 2))                          # back to NCHW


# --------------------------------------------------------------------------
# Pure-JAX reference (numerical validation)
# --------------------------------------------------------------------------
def residual_reference(params, x_nchw, *, strides=1):
    x = jnp.transpose(x_nchw, (0, 2, 3, 1)).astype(jnp.float32)
    dn = ("NHWC", "HWIO", "NHWC")

    def bn(y, g, b):
        mean = jnp.mean(y, axis=(0, 1, 2), keepdims=True)
        var = jnp.mean((y - mean) ** 2, axis=(0, 1, 2), keepdims=True)
        return (y - mean) * jax.lax.rsqrt(var + BN_EPS) * g + b

    y = jax.lax.conv_general_dilated(x, params["w1"], (strides, strides),
                                     ((1, 1), (1, 1)), dimension_numbers=dn) + params["b1"]
    y = jnp.maximum(bn(y, params["bn1_gamma"], params["bn1_beta"]), 0.0)
    y = jax.lax.conv_general_dilated(y, params["w2"], (1, 1),
                                     ((1, 1), (1, 1)), dimension_numbers=dn) + params["b2"]
    y = bn(y, params["bn2_gamma"], params["bn2_beta"])
    if "w3" in params:
        w3 = params["w3"].reshape(1, 1, *params["w3"].shape)
        sc = jax.lax.conv_general_dilated(x, w3, (strides, strides),
                                          ((0, 0), (0, 0)), dimension_numbers=dn) + params["b3"]
    else:
        sc = x
    y = jnp.maximum(y + sc, 0.0)
    return jnp.transpose(y, (0, 3, 1, 2))


if __name__ == "__main__":
    key = jax.random.PRNGKey(0)
    kx, kp1, kp2 = jax.random.split(key, 3)
    x = jax.random.normal(kx, (2, 4, 16, 16), jnp.float32)   # NCHW

    params1 = init_residual_params(kp1, 4, 4, use_1x1conv=False)
    params2 = init_residual_params(kp2, 4, 8, use_1x1conv=True)
    ref1 = residual_reference(params1, x, strides=1)
    ref2 = residual_reference(params2, x, strides=2)

    # Exact path: f32 operands and f32 intermediates.
    out1 = jax.block_until_ready(
        residual_forward(params1, x, strides=1, compute_dtype=jnp.float32))
    assert out1.shape == (2, 4, 16, 16)
    np.testing.assert_allclose(np.asarray(out1), np.asarray(ref1), atol=5e-4, rtol=5e-4)

    out2 = jax.block_until_ready(
        residual_forward(params2, x, strides=2, compute_dtype=jnp.float32))
    assert out2.shape == (2, 8, 8, 8)
    np.testing.assert_allclose(np.asarray(out2), np.asarray(ref2), atol=5e-4, rtol=5e-4)

    # Fast path: bf16 operands AND bf16 intermediate storage (f32 accumulation
    # / f32 BN statistics).  Rounding through two conv + BN stages accumulates
    # to a few percent vs. the f32 reference, hence the loose tolerance.
    out1b = jax.block_until_ready(
        residual_forward(params1, x, strides=1, compute_dtype=jnp.bfloat16))
    np.testing.assert_allclose(np.asarray(out1b), np.asarray(ref1), atol=1.5e-1, rtol=1.5e-1)

    out2b = jax.block_until_ready(
        residual_forward(params2, x, strides=2, compute_dtype=jnp.bfloat16))
    np.testing.assert_allclose(np.asarray(out2b), np.asarray(ref2), atol=1.5e-1, rtol=1.5e-1)

    print("KERNEL_OK")
</pallas_src>

<mosaic_0001>
module attributes {stable_mosaic.version = 11 : i64} {
  func.func @_conv_stats_kernel(%arg0: i32, %arg1: i32, %arg2: memref<256x36xf32, #tpu.memory_space<vmem>>, %arg3: memref<36x4xf32, #tpu.memory_space<vmem>>, %arg4: memref<256x4xf32, #tpu.memory_space<vmem>>, %arg5: memref<1x2x4xf32, #tpu.memory_space<vmem>>, %arg6: memref<256x4xf32, #tpu.memory_space<vmem>>) attributes {dimension_semantics = [#tpu.dimension_semantics<parallel>, #tpu.dimension_semantics<arbitrary>], iteration_bounds = array<i64: 2, 1>, scalar_prefetch = 0 : i64, scratch_operands = 1 : i64, tpu.core_type = #tpu.core_type<tc>, window_params = [{transform_indices = @transform_0, window_bounds = array<i64: 256, 36>}, {transform_indices = @transform_1, window_bounds = array<i64: 36, 4>}, {transform_indices = @transform_2, window_bounds = array<i64: 256, 4>}, {transform_indices = @transform_3, window_bounds = array<i64: 1, 2, 4>}]} {
    %c0_i32 = arith.constant 0 : i32
    %0 = arith.cmpi eq, %arg1, %c0_i32 : i32
    %1 = arith.extui %0 : i1 to i32
    %c0_i32_0 = arith.constant 0 : i32
    %2 = arith.cmpi ne, %1, %c0_i32_0 : i32
    scf.if %2 {
      %cst_10 = arith.constant 0.000000e+00 : f32
      %12 = vector.broadcast %cst_10 : f32 to vector<256x4xf32>
      %c0_11 = arith.constant 0 : index
      %c0_12 = arith.constant 0 : index
      %13 = vector.load %arg6[%c0_11, %c0_12] : memref<256x4xf32, #tpu.memory_space<vmem>>, vector<256x4xf32>
      tpu.vector_store %arg6[%c0_11, %c0_12], %12 {strides = array<i32>} : memref<256x4xf32, #tpu.memory_space<vmem>>, vector<256x4xf32>,
    } else {
    }
    %c0 = arith.constant 0 : index
    %c0_1 = arith.constant 0 : index
    %3 = vector.load %arg6[%c0, %c0_1] : memref<256x4xf32, #tpu.memory_space<vmem>>, vector<256x4xf32>
    %c0_2 = arith.constant 0 : index
    %c0_3 = arith.constant 0 : index
    %4 = vector.load %arg2[%c0_2, %c0_3] : memref<256x36xf32, #tpu.memory_space<vmem>>, vector<256x36xf32>
    %c0_4 = arith.constant 0 : index
    %c0_5 = arith.constant 0 : index
    %5 = vector.load %arg3[%c0_4, %c0_5] : memref<36x4xf32, #tpu.memory_space<vmem>>, vector<36x4xf32>
    %cst = arith.constant dense<0.000000e+00> : vector<256x4xf32>
    %6 = tpu.matmul %4, %5, %cst {dimension_numbers = #tpu.dot_dimension_numbers<[1], [0], [0], [1], [0, 0, 1, 1], [], []>} : vector<256x36xf32>, vector<36x4xf32>, vector<256x4xf32> -> vector<256x4xf32>
    %7 = arith.addf %3, %6 : vector<256x4xf32>
    %c0_6 = arith.constant 0 : index
    %c0_7 = arith.constant 0 : index
    %8 = vector.load %arg6[%c0_6, %c0_7] : memref<256x4xf32, #tpu.memory_space<vmem>>, vector<256x4xf32>
    tpu.vector_store %arg6[%c0_6, %c0_7], %7 {strides = array<i32>} : memref<256x4xf32, #tpu.memory_space<vmem>>, vector<256x4xf32>,
    %c0_i32_8 = arith.constant 0 : i32
    %9 = arith.cmpi eq, %arg1, %c0_i32_8 : i32
    %10 = arith.extui %9 : i1 to i32
    %c0_i32_9 = arith.constant 0 : i32
    %11 = arith.cmpi ne, %10, %c0_i32_9 : i32
    scf.if %11 {
      %c0_10 = arith.constant 0 : index
      %c0_11 = arith.constant 0 : index
      %12 = vector.load %arg6[%c0_10, %c0_11] : memref<256x4xf32, #tpu.memory_space<vmem>>, vector<256x4xf32>
      %c0_12 = arith.constant 0 : index
      %c0_13 = arith.constant 0 : index
      %13 = vector.load %arg4[%c0_12, %c0_13] : memref<256x4xf32, #tpu.memory_space<vmem>>, vector<256x4xf32>
      tpu.vector_store %arg4[%c0_12, %c0_13], %12 {strides = array<i32>} : memref<256x4xf32, #tpu.memory_space<vmem>>, vector<256x4xf32>,
      %cst_14 = arith.constant dense<0.000000e+00> : vector<4xf32>
      %14 = vector.multi_reduction <add>, %12, %cst_14 [0] : vector<256x4xf32> to vector<4xf32>
      %15 = vector.shape_cast %14 : vector<4xf32> to vector<1x4xf32>
      %c0_15 = arith.constant 0 : index
      %c0_16 = arith.constant 0 : index
      %c0_17 = arith.constant 0 : index
      %16 = vector.load %arg5[%c0_15, %c0_16, %c0_17] : memref<1x2x4xf32, #tpu.memory_space<vmem>>, vector<1x1x4xf32>
      %17 = vector.shape_cast %16 : vector<1x1x4xf32> to vector<1x4xf32>
      %18 = vector.shape_cast %15 : vector<1x4xf32> to vector<1x1x4xf32>
      tpu.vector_store %arg5[%c0_15, %c0_16, %c0_17], %18 {strides = array<i32>} : memref<1x2x4xf32, #tpu.memory_space<vmem>>, vector<1x1x4xf32>,
      %19 = arith.mulf %12, %12 : vector<256x4xf32>
      %cst_18 = arith.constant dense<0.000000e+00> : vector<4xf32>
      %20 = vector.multi_reduction <add>, %19, %cst_18 [0] : vector<256x4xf32> to vector<4xf32>
      %21 = vector.shape_cast %20 : vector<4xf32> to vector<1x4xf32>
      %c0_19 = arith.constant 0 : index
      %c1 = arith.constant 1 : index
      %c0_20 = arith.constant 0 : index
      %22 = vector.load %arg5[%c0_19, %c1, %c0_20] : memref<1x2x4xf32, #tpu.memory_space<vmem>>, vector<1x1x4xf32>
      %23 = vector.shape_cast %22 : vector<1x1x4xf32> to vector<1x4xf32>
      %24 = vector.shape_cast %21 : vector<1x4xf32> to vector<1x1x4xf32>
      tpu.vector_store %arg5[%c0_19, %c1, %c0_20], %24 {strides = array<i32>} : memref<1x2x4xf32, #tpu.memory_space<vmem>>, vector<1x1x4xf32>,
    } else {
    }
    return
  }
  func.func @transform_0(%arg0: i32, %arg1: i32) -> (i32, i32) {
    %c0_i32 = arith.constant 0 : i32
    return %arg0, %arg1 : i32, i32
  }
  func.func @transform_1(%arg0: i32, %arg1: i32) -> (i32, i32) {
    %c0_i32 = arith.constant 0 : i32
    %c0_i32_0 = arith.constant 0 : i32
    return %arg1, %c0_i32 : i32, i32
  }
  func.func @transform_2(%arg0: i32, %arg1: i32) -> (i32, i32) {
    %c0_i32 = arith.constant 0 : i32
    %c0_i32_0 = arith.constant 0 : i32
    return %arg0, %c0_i32 : i32, i32
  }
  func.func @transform_3(%arg0: i32, %arg1: i32) -> (i32, i32, i32) {
    %c0_i32 = arith.constant 0 : i32
    %c0_i32_0 = arith.constant 0 : i32
    %c0_i32_1 = arith.constant 0 : i32
    return %arg0, %c0_i32, %c0_i32_0 : i32, i32, i32
  }
}

module attributes {stable_mosaic.version = 11 : i64} {
  func.func @_scale_shift_relu_kernel(%arg0: i32, %arg1: memref<16x128xf32, #tpu.memory_space<vmem>>, %arg2: memref<1x128xf32, #tpu.memory_space<vmem>>, %arg3: memref<1x128xf32, #tpu.memory_space<vmem>>, %arg4: memref<16x128xf32, #tpu.memory_space<vmem>>) attributes {dimension_semantics = [#tpu.dimension_semantics<parallel>], iteration_bounds = array<i64: 1>, scalar_prefetch = 0 : i64, scratch_operands = 0 : i64, tpu.core_type = #tpu.core_type<tc>, window_params = [{transform_indices = @transform_0, window_bounds = array<i64: 16, 128>}, {pipeline_mode = #tpu.pipeline_mode<synchronous>, transform_indices = @transform_1, window_bounds = array<i64: 1, 128>}, {pipeline_mode = #tpu.pipeline_mode<synchronous>, transform_indices = @transform_2, window_bounds = array<i64: 1, 128>}, {transform_indices = @transform_3, window_bounds = array<i64: 16, 128>}]} {
    %c0 = arith.constant 0 : index
    %c0_0 = arith.constant 0 : index
    %0 = vector.load %arg1[%c0, %c0_0] : memref<16x128xf32, #tpu.memory_space<vmem>>, vector<16x128xf32>
    %c0_1 = arith.constant 0 : index
    %c0_2 = arith.constant 0 : index
    %1 = vector.load %arg2[%c0_1, %c0_2] : memref<1x128xf32, #tpu.memory_space<vmem>>, vector<1x128xf32>
    %2 = vector.broadcast %1 : vector<1x128xf32> to vector<16x128xf32>
    %3 = arith.mulf %0, %2 : vector<16x128xf32>
    %c0_3 = arith.constant 0 : index
    %c0_4 = arith.constant 0 : index
    %4 = vector.load %arg3[%c0_3, %c0_4] : memref<1x128xf32, #tpu.memory_space<vmem>>, vector<1x128xf32>
    %5 = vector.broadcast %4 : vector<1x128xf32> to vector<16x128xf32>
    %6 = arith.addf %3, %5 : vector<16x128xf32>
    %cst = arith.constant 0.000000e+00 : f32
    %7 = vector.broadcast %cst : f32 to vector<16x128xf32>
    %8 = arith.maximumf %6, %7 : vector<16x128xf32>
    %c0_5 = arith.constant 0 : index
    %c0_6 = arith.constant 0 : index
    %9 = vector.load %arg4[%c0_5, %c0_6] : memref<16x128xf32, #tpu.memory_space<vmem>>, vector<16x128xf32>
    tpu.vector_store %arg4[%c0_5, %c0_6], %8 {strides = array<i32>} : memref<16x128xf32, #tpu.memory_space<vmem>>, vector<16x128xf32>,
    return
  }
  func.func @transform_0(%arg0: i32) -> (i32, i32) {
    %c0_i32 = arith.constant 0 : i32
    %c0_i32_0 = arith.constant 0 : i32
    return %arg0, %c0_i32 : i32, i32
  }
  func.func @transform_1(%arg0: i32) -> (i32, i32) {
    %c0_i32 = arith.constant 0 : i32
    %c0_i32_0 = arith.constant 0 : i32
    %c0_i32_1 = arith.constant 0 : i32
    return %c0_i32, %c0_i32_0 : i32, i32
  }
  func.func @transform_2(%arg0: i32) -> (i32, i32) {
    %c0_i32 = arith.constant 0 : i32
    %c0_i32_0 = arith.constant 0 : i32
    %c0_i32_1 = arith.constant 0 : i32
    return %c0_i32, %c0_i32_0 : i32, i32
  }
  func.func @transform_3(%arg0: i32) -> (i32, i32) {
    %c0_i32 = arith.constant 0 : i32
    %c0_i32_0 = arith.constant 0 : i32
    return %arg0, %c0_i32 : i32, i32
  }
}

module attributes {stable_mosaic.version = 11 : i64} {
  func.func @_scale_shift_add_relu_kernel(%arg0: i32, %arg1: memref<16x128xf32, #tpu.memory_space<vmem>>, %arg2: memref<16x128xf32, #tpu.memory_space<vmem>>, %arg3: memref<1x128xf32, #tpu.memory_space<vmem>>, %arg4: memref<1x128xf32, #tpu.memory_space<vmem>>, %arg5: memref<16x128xf32, #tpu.memory_space<vmem>>) attributes {dimension_semantics = [#tpu.dimension_semantics<parallel>], iteration_bounds = array<i64: 1>, scalar_prefetch = 0 : i64, scratch_operands = 0 : i64, tpu.core_type = #tpu.core_type<tc>, window_params = [{transform_indices = @transform_0, window_bounds = array<i64: 16, 128>}, {transform_indices = @transform_1, window_bounds = array<i64: 16, 128>}, {pipeline_mode = #tpu.pipeline_mode<synchronous>, transform_indices = @transform_2, window_bounds = array<i64: 1, 128>}, {pipeline_mode = #tpu.pipeline_mode<synchronous>, transform_indices = @transform_3, window_bounds = array<i64: 1, 128>}, {transform_indices = @transform_4, window_bounds = array<i64: 16, 128>}]} {
    %c0 = arith.constant 0 : index
    %c0_0 = arith.constant 0 : index
    %0 = vector.load %arg1[%c0, %c0_0] : memref<16x128xf32, #tpu.memory_space<vmem>>, vector<16x128xf32>
    %c0_1 = arith.constant 0 : index
    %c0_2 = arith.constant 0 : index
    %1 = vector.load %arg3[%c0_1, %c0_2] : memref<1x128xf32, #tpu.memory_space<vmem>>, vector<1x128xf32>
    %2 = vector.broadcast %1 : vector<1x128xf32> to vector<16x128xf32>
    %3 = arith.mulf %0, %2 : vector<16x128xf32>
    %c0_3 = arith.constant 0 : index
    %c0_4 = arith.constant 0 : index
    %4 = vector.load %arg4[%c0_3, %c0_4] : memref<1x128xf32, #tpu.memory_space<vmem>>, vector<1x128xf32>
    %5 = vector.broadcast %4 : vector<1x128xf32> to vector<16x128xf32>
    %6 = arith.addf %3, %5 : vector<16x128xf32>
    %c0_5 = arith.constant 0 : index
    %c0_6 = arith.constant 0 : index
    %7 = vector.load %arg2[%c0_5, %c0_6] : memref<16x128xf32, #tpu.memory_space<vmem>>, vector<16x128xf32>
    %8 = arith.addf %6, %7 : vector<16x128xf32>
    %cst = arith.constant 0.000000e+00 : f32
    %9 = vector.broadcast %cst : f32 to vector<16x128xf32>
    %10 = arith.maximumf %8, %9 : vector<16x128xf32>
    %c0_7 = arith.constant 0 : index
    %c0_8 = arith.constant 0 : index
    %11 = vector.load %arg5[%c0_7, %c0_8] : memref<16x128xf32, #tpu.memory_space<vmem>>, vector<16x128xf32>
    tpu.vector_store %arg5[%c0_7, %c0_8], %10 {strides = array<i32>} : memref<16x128xf32, #tpu.memory_space<vmem>>, vector<16x128xf32>,
    return
  }
  func.func @transform_0(%arg0: i32) -> (i32, i32) {
    %c0_i32 = arith.constant 0 : i32
    %c0_i32_0 = arith.constant 0 : i32
    return %arg0, %c0_i32 : i32, i32
  }
  func.func @transform_1(%arg0: i32) -> (i32, i32) {
    %c0_i32 = arith.constant 0 : i32
    %c0_i32_0 = arith.constant 0 : i32
    return %arg0, %c0_i32 : i32, i32
  }
  func.func @transform_2(%arg0: i32) -> (i32, i32) {
    %c0_i32 = arith.constant 0 : i32
    %c0_i32_0 = arith.constant 0 : i32
    %c0_i32_1 = arith.constant 0 : i32
    return %c0_i32, %c0_i32_0 : i32, i32
  }
  func.func @transform_3(%arg0: i32) -> (i32, i32) {
    %c0_i32 = arith.constant 0 : i32
    %c0_i32_0 = arith.constant 0 : i32
    %c0_i32_1 = arith.constant 0 : i32
    return %c0_i32, %c0_i32_0 : i32, i32
  }
  func.func @transform_4(%arg0: i32) -> (i32, i32) {
    %c0_i32 = arith.constant 0 : i32
    %c0_i32_0 = arith.constant 0 : i32
    return %arg0, %c0_i32 : i32, i32
  }
}

</mosaic_0001>

<llo_original>
// kernel: residual_forward.4
$region0: #{residual_forward.4}
  #allocation0 [shape = 'u32[]', space=smem, size = 0x4, offset = 0x4, fixed_abs, tag = 'smem constant byte address 0x4 - core index']
  #allocation1 [shape = 'u32[144,128]{1,0:T(1,128)}', space=vmem, size = 0x12000, scoped, tag = 'internal scratch']
  #allocation2 [shape = 'f32[256,4]{1,0:T(8,128)}', space=vmem, size = 0x20000, scoped, tag = 'scratch operand']
  %s0 = inlined_call_operand.vmem [shape: f32[512,36], index: 0, kind: input, shape index: {}]
  %s1 = inlined_call_operand.vmem [shape: f32[36,4], index: 1, kind: input, shape index: {}]
  %s2 = inlined_call_operand.vmem [shape: f32[512,4], index: 2, kind: output, shape index: {0}]
  %s3 = inlined_call_operand.vmem [shape: f32[2,2,4], index: 3, kind: output, shape index: {1}]
  %4 = xla_tuple %s2, %s3
  %s5 = sld [smem:[#allocation0]]
  $region57: #{residual_forward.4} parent=0
    _
  %s7 = ssub.s32 1, %s5
  %s8 = scalar_select 0, %s7, %s5
  loop: start=0, step=1, limit=4
  $region2: #{residual_forward.4} parent=0 // loop_pre_header
    _
  $region3: #{residual_forward.4} parent=0 // loop_header
    %s10 = sphi 0, %s14
    %p11 = scmp.ge.s32.totalorder %s10, 4
    %s17 = sphi 0, %s29
    %s18 = sphi 0, %s25
    %s19 = sphi 0, %s17
    %s20 = sphi 0, %s18
    %s21 = sphi 0, %s19
    %s22 = sphi 0, %s20
    %s34 = sphi 0, %s36
    %s37 = sphi 0, %s34
    %s38 = sphi 0, %s37
    %s54 = sphi 0, %s38
    %s60 = sphi 0, %s62
    %s63 = sphi 0, %s60
    %s64 = sphi 0, %s63
    %s80 = sphi 0, %s64
    %s86 = sphi 0, %s88
    %s89 = sphi 0, %s86
    %s90 = sphi 0, %s89
    %s106 = sphi 0, %s90
    %s112 = sphi 0, %s114
    %s115 = sphi 0, %s112
    %s116 = sphi 0, %s115
    %s132 = sphi 0, %s116
  $region4: #{residual_forward.4} parent=0 // loop_header_branch
    %13 = sbr.rel (%p11) target = $region8
  $region5: #{residual_forward.4} parent=0 // loop_body
    %s15 = ssub.s32 %s10, 1
    %s16 = ssub.s32 %s10, 2
    %s23 = sadd.s32 1, %s18
    %p24 = scmp.ge.s32.totalorder %s23, 1
    %s25 = scalar_select %p24, 0, %s23
    %s26 = sadd.s32 1, %s17
    %s27 = scalar_select %p24, %s26, %s17
    %p28 = scmp.ge.s32.totalorder %s27, 2
    %s29 = scalar_select %p28, 0, %s27
    %s30 = ssub.s32 %s17, %s29
    %s31 = ssub.s32 %s18, %s25
    %s32 = sor.u32 %s30, %s31
    %p33 = scmp.eq.s32.totalorder %s32, 0
    %s35 = sadd.s32 %s34, 1
    %s36 = scalar_select %p33, %s34, %s35
    %p39 = pneg %p33
    %p40 = scmp.eq.s32.totalorder %s10, 1
    %p41 = por %p39, %p40
    %p42 = scmp.ne.s32.totalorder %s34, %s37
    %p43 = scmp.eq.s32.totalorder %s10, 0
    %p44 = por %p42, %p43
    %p45 = scmp.ne.s32.totalorder %s34, %s37
    %p46 = scmp.eq.s32.totalorder %s15, 1
    %p47 = por %p45, %p46
    %p48 = scmp.ne.s32.totalorder %s37, %s38
    %p49 = scmp.eq.s32.totalorder %s15, 0
    %p50 = por %p48, %p49
    %p51 = scmp.ne.s32.totalorder %s37, %s38
    %p52 = scmp.eq.s32.totalorder %s16, 1
    %p53 = por %p51, %p52
    %p55 = scmp.ne.s32.totalorder %s38, %s54
    %p56 = scmp.eq.s32.totalorder %s16, 0
    %p57 = por %p55, %p56
    %s58 = ssub.s32 %s18, %s25
    %p59 = scmp.eq.s32.totalorder %s58, 0
    %s61 = sadd.s32 %s60, 1
    %s62 = scalar_select %p59, %s60, %s61
    %p65 = pneg %p59
    %p66 = scmp.eq.s32.totalorder %s10, 1
    %p67 = por %p65, %p66
    %p68 = scmp.ne.s32.totalorder %s60, %s63
    %p69 = scmp.eq.s32.totalorder %s10, 0
    %p70 = por %p68, %p69
    %p71 = scmp.ne.s32.totalorder %s60, %s63
    %p72 = scmp.eq.s32.totalorder %s15, 1
    %p73 = por %p71, %p72
    %p74 = scmp.ne.s32.totalorder %s63, %s64
    %p75 = scmp.eq.s32.totalorder %s15, 0
    %p76 = por %p74, %p75
    %p77 = scmp.ne.s32.totalorder %s63, %s64
    %p78 = scmp.eq.s32.totalorder %s16, 1
    %p79 = por %p77, %p78
    %p81 = scmp.ne.s32.totalorder %s64, %s80
    %p82 = scmp.eq.s32.totalorder %s16, 0
    %p83 = por %p81, %p82
    %s84 = ssub.s32 %s17, %s29
    %p85 = scmp.eq.s32.totalorder %s84, 0
    %s87 = sadd.s32 %s86, 1
    %s88 = scalar_select %p85, %s86, %s87
    %p91 = pneg %p85
    %p92 = scmp.eq.s32.totalorder %s10, 1
    %p93 = por %p91, %p92
    %p94 = scmp.ne.s32.totalorder %s86, %s89
    %p95 = scmp.eq.s32.totalorder %s10, 0
    %p96 = por %p94, %p95
    %p97 = scmp.ne.s32.totalorder %s86, %s89
    %p98 = scmp.eq.s32.totalorder %s15, 1
    %p99 = por %p97, %p98
    %p100 = scmp.ne.s32.totalorder %s89, %s90
    %p101 = scmp.eq.s32.totalorder %s15, 0
    %p102 = por %p100, %p101
    %p103 = scmp.ne.s32.totalorder %s89, %s90
    %p104 = scmp.eq.s32.totalorder %s16, 1
    %p105 = por %p103, %p104
    %p107 = scmp.ne.s32.totalorder %s90, %s106
    %p108 = scmp.eq.s32.totalorder %s16, 0
    %p109 = por %p107, %p108
    %s110 = ssub.s32 %s17, %s29
    %p111 = scmp.eq.s32.totalorder %s110, 0
    %s113 = sadd.s32 %s112, 1
    %s114 = scalar_select %p111, %s112, %s113
    %p117 = pneg %p111
    %p118 = scmp.eq.s32.totalorder %s10, 1
    %p119 = por %p117, %p118
    %p120 = scmp.ne.s32.totalorder %s112, %s115
    %p121 = scmp.eq.s32.totalorder %s10, 0
    %p122 = por %p120, %p121
    %p123 = scmp.ne.s32.totalorder %s112, %s115
    %p124 = scmp.eq.s32.totalorder %s15, 1
    %p125 = por %p123, %p124
    %p126 = scmp.ne.s32.totalorder %s115, %s116
    %p127 = scmp.eq.s32.totalorder %s15, 0
    %p128 = por %p126, %p127
    %p129 = scmp.ne.s32.totalorder %s115, %s116
    %p130 = scmp.eq.s32.totalorder %s16, 1
    %p131 = por %p129, %p130
    %p133 = scmp.ne.s32.totalorder %s116, %s132
    %p134 = scmp.eq.s32.totalorder %s16, 0
    %p135 = por %p133, %p134
    %p136 = scmp.le.s32.totalorder 1, %s10
    %p137 = scmp.lt.s32.totalorder %s10, 3
    %p138 = pnand %p136, %p137
    %p139 = pneg %p138
    // Predicated region
    $region9: #{residual_forward.4} parent=5 // pred_check
      _
    $region10: #{residual_forward.4} parent=5 // pred_check_branch
      %141 = sbr.rel (%p138) target = $region12
    $region11: #{residual_forward.4} parent=5 // pred_region
      %s142 = ssub.s32 %s10, 1
      // Predicated region
      $region13: #{residual_forward.4} parent=11 // pred_check
        %p143 = pneg %p76
      $region14: #{residual_forward.4} parent=11 // pred_check_branch
        %145 = sbr.rel (%p143) target = $region16
      $region15: #{residual_forward.4} parent=11 // pred_region
        %s146 = smul.u32 5, %s20
        %p147 = scmp.lt.s32.totalorder %s146, 4
        %s148 = scalar_select %p147, %s146, 4
        %s149 = smul.addr %s148, 8
        %s150 = scalar_lea.vmem %s1, %s149
        %s151 = smul.u32 5, %s20
      $region16: #{residual_forward.4} parent=11 // pred_fallthru
        _
    $region12: #{residual_forward.4} parent=5 // pred_fallthru
      _
    %p152 = scmp.lt.s32.totalorder %s10, 2
    // Predicated region
    $region17: #{residual_forward.4} parent=5 // pred_check
      %p153 = pneg %p152
    $region18: #{residual_forward.4} parent=5 // pred_check_branch
      %155 = sbr.rel (%p153) target = $region20
    $region19: #{residual_forward.4} parent=5 // pred_region
      // Predicated region
      $region21: #{residual_forward.4} parent=19 // pred_check
        %p156 = pneg %p44
      $region22: #{residual_forward.4} parent=19 // pred_check_branch
        %158 = sbr.rel (%p156) target = $region24
      $region23: #{residual_forward.4} parent=19 // pred_region
        %s159 = smul.u32 32, %s17
        %p160 = scmp.lt.s32.totalorder %s159, 63
        %s161 = scalar_select %p160, %s159, 63
        %p162 = scmp.lt.s32.totalorder %s18, 0
        %s163 = scalar_select %p162, %s18, 0
        %s164 = sadd.s32 %s163, %s161
        %s165 = smul.addr %s164, 8
        %s166 = scalar_lea.vmem %s0, %s165
        %s167 = smul.u32 32, %s17
      $region24: #{residual_forward.4} parent=19 // pred_fallthru
        _
    $region20: #{residual_forward.4} parent=5 // pred_fallthru
      _
    %p168 = scmp.le.s32.totalorder 1, %s10
    %p169 = scmp.lt.s32.totalorder %s10, 3
    %p170 = pnand %p168, %p169
    %p171 = pneg %p170
    // Predicated region
    $region25: #{residual_forward.4} parent=5 // pred_check
      _
    $region26: #{residual_forward.4} parent=5 // pred_check_branch
      %173 = sbr.rel (%p170) target = $region28
    $region27: #{residual_forward.4} parent=5 // pred_region
      %s174 = ssub.s32 %s10, 1
      %s175 = smul.u32 32, %s19
      %p176 = scmp.lt.s32.totalorder %s175, 63
      %s177 = scalar_select %p176, %s175, 63
      %p178 = scmp.lt.s32.totalorder %s20, 0
      %s179 = scalar_select %p178, %s20, 0
      %s180 = sadd.s32 %s179, %s177
      %s181 = smul.addr %s180, 8
      %s182 = scalar_lea.vmem %s0, %s181
      %p183 = pneg %p50
      %p184 = pneg %p47
      %s185 = smul.u32 5, %s20
      %p186 = scmp.lt.s32.totalorder %s185, 4
      %s187 = scalar_select %p186, %s185, 4
      %s188 = smul.addr %s187, 8
      %s189 = scalar_lea.vmem %s1, %s188
      %p190 = pneg %p76
      %p191 = pneg %p73
      %p192 = pneg %p102
      %p193 = pneg %p99
      %s194 = smul.u32 32, %s19
      %p195 = scmp.lt.s32.totalorder %s194, 63
      %s196 = scalar_select %p195, %s194, 63
      %s197 = smul.addr %s196, 8
      %s198 = scalar_lea.vmem %s2, %s197
      %p199 = pneg %p128
      %p200 = pneg %p125
      %p201 = scmp.lt.s32.totalorder %s19, 1
      %s202 = scalar_select %p201, %s19, 1
      %s203 = smul.addr %s202, 2
      %s204 = scalar_lea.vmem %s3, %s203
      %s205 = smul.u32 32, %s19
      %p206 = scmp.lt.s32.totalorder %s205, 63
      %s207 = scalar_select %p206, %s205, 63
      %p208 = scmp.lt.s32.totalorder %s20, 0
      %s209 = scalar_select %p208, %s20, 0
      %s210 = sadd.s32 %s209, %s207
      %s211 = smul.addr %s210, 8
      %s212 = scalar_lea.vmem %s0, %s211
      %s213 = smul.u32 32, %s19
      %s214 = smul.u32 5, %s20
      %p215 = scmp.lt.s32.totalorder %s214, 4
      %s216 = scalar_select %p215, %s214, 4
      %s217 = smul.addr %s216, 8
      %s218 = scalar_lea.vmem %s1, %s217
      %s219 = smul.u32 5, %s20
      %s220 = smul.u32 32, %s19
      %p221 = scmp.lt.s32.totalorder %s220, 63
      %s222 = scalar_select %p221, %s220, 63
      %s223 = smul.addr %s222, 8
      %s224 = scalar_lea.vmem %s2, %s223
      %s225 = smul.u32 32, %s19
      %p226 = scmp.lt.s32.totalorder %s19, 1
      %s227 = scalar_select %p226, %s19, 1
      %s228 = smul.addr %s227, 2
      %s229 = scalar_lea.vmem %s3, %s228
      %p230 = scmp.eq.s32.totalorder %s20, 0
      // Predicated region
      $region29: #{residual_forward.4} parent=27 // pred_check
        %p231 = pneg %p230
      $region30: #{residual_forward.4} parent=27 // pred_check_branch
        %233 = sbr.rel (%p231) target = $region32
      $region31: #{residual_forward.4} parent=27 // pred_region
        %vm234 = vcmask 31744
        %235 = vst.msk [vmem:[#allocation2] sm:$0xff] %vm234, 0.0
        %236 = vst.msk [vmem:[#allocation2 + $0x8] sm:$0xff] %vm234, 0.0
        %237 = vst.msk [vmem:[#allocation2 + $0x10] sm:$0xff] %vm234, 0.0
        %238 = vst.msk [vmem:[#allocation2 + $0x18] sm:$0xff] %vm234, 0.0
        %239 = vst.msk [vmem:[#allocation2 + $0x20] sm:$0xff] %vm234, 0.0
        %240 = vst.msk [vmem:[#allocation2 + $0x28] sm:$0xff] %vm234, 0.0
        %241 = vst.msk [vmem:[#allocation2 + $0x30] sm:$0xff] %vm234, 0.0
        %242 = vst.msk [vmem:[#allocation2 + $0x38] sm:$0xff] %vm234, 0.0
        %243 = vst.msk [vmem:[#allocation2 + $0x40] sm:$0xff] %vm234, 0.0
        %244 = vst.msk [vmem:[#allocation2 + $0x48] sm:$0xff] %vm234, 0.0
        %245 = vst.msk [vmem:[#allocation2 + $0x50] sm:$0xff] %vm234, 0.0
        %246 = vst.msk [vmem:[#allocation2 + $0x58] sm:$0xff] %vm234, 0.0
        %247 = vst.msk [vmem:[#allocation2 + $0x60] sm:$0xff] %vm234, 0.0
        %248 = vst.msk [vmem:[#allocation2 + $0x68] sm:$0xff] %vm234, 0.0
        %249 = vst.msk [vmem:[#allocation2 + $0x70] sm:$0xff] %vm234, 0.0
        %250 = vst.msk [vmem:[#allocation2 + $0x78] sm:$0xff] %vm234, 0.0
        %251 = vst.msk [vmem:[#allocation2 + $0x80] sm:$0xff] %vm234, 0.0
        %252 = vst.msk [vmem:[#allocation2 + $0x88] sm:$0xff] %vm234, 0.0
        %253 = vst.msk [vmem:[#allocation2 + $0x90] sm:$0xff] %vm234, 0.0
        %254 = vst.msk [vmem:[#allocation2 + $0x98] sm:$0xff] %vm234, 0.0
        %255 = vst.msk [vmem:[#allocation2 + $0xa0] sm:$0xff] %vm234, 0.0
        %256 = vst.msk [vmem:[#allocation2 + $0xa8] sm:$0xff] %vm234, 0.0
        %257 = vst.msk [vmem:[#allocation2 + $0xb0] sm:$0xff] %vm234, 0.0
        %258 = vst.msk [vmem:[#allocation2 + $0xb8] sm:$0xff] %vm234, 0.0
        %259 = vst.msk [vmem:[#allocation2 + $0xc0] sm:$0xff] %vm234, 0.0
        %260 = vst.msk [vmem:[#allocation2 + $0xc8] sm:$0xff] %vm234, 0.0
        %261 = vst.msk [vmem:[#allocation2 + $0xd0] sm:$0xff] %vm234, 0.0
        %262 = vst.msk [vmem:[#allocation2 + $0xd8] sm:$0xff] %vm234, 0.0
        %263 = vst.msk [vmem:[#allocation2 + $0xe0] sm:$0xff] %vm234, 0.0
        %264 = vst.msk [vmem:[#allocation2 + $0xe8] sm:$0xff] %vm234, 0.0
        %265 = vst.msk [vmem:[#allocation2 + $0xf0] sm:$0xff] %vm234, 0.0
        %266 = vst.msk [vmem:[#allocation2 + $0xf8] sm:$0xff] %vm234, 0.0
      $region32: #{residual_forward.4} parent=27 // pred_fallthru
        _
      %v267 = vld [vmem:[#allocation2] sm:$0xff]
      %v268 = vld [vmem:[#allocation2 + $0x8] sm:$0xff]
      %v269 = vld [vmem:[#allocation2 + $0x10] sm:$0xff]
      %v270 = vld [vmem:[#allocation2 + $0x18] sm:$0xff]
      %v271 = vld [vmem:[#allocation2 + $0x20] sm:$0xff]
      %v272 = vld [vmem:[#allocation2 + $0x28] sm:$0xff]
      %v273 = vld [vmem:[#allocation2 + $0x30] sm:$0xff]
      %v274 = vld [vmem:[#allocation2 + $0x38] sm:$0xff]
      %v275 = vld [vmem:[#allocation2 + $0x40] sm:$0xff]
      %v276 = vld [vmem:[#allocation2 + $0x48] sm:$0xff]
      %v277 = vld [vmem:[#allocation2 + $0x50] sm:$0xff]
      %v278 = vld [vmem:[#allocation2 + $0x58] sm:$0xff]
      %v279 = vld [vmem:[#allocation2 + $0x60] sm:$0xff]
      %v280 = vld [vmem:[#allocation2 + $0x68] sm:$0xff]
      %v281 = vld [vmem:[#allocation2 + $0x70] sm:$0xff]
      %v282 = vld [vmem:[#allocation2 + $0x78] sm:$0xff]
      %v283 = vld [vmem:[#allocation2 + $0x80] sm:$0xff]
      %v284 = vld [vmem:[#allocation2 + $0x88] sm:$0xff]
      %v285 = vld [vmem:[#allocation2 + $0x90] sm:$0xff]
      %v286 = vld [vmem:[#allocation2 + $0x98] sm:$0xff]
      %v287 = vld [vmem:[#allocation2 + $0xa0] sm:$0xff]
      %v288 = vld [vmem:[#allocation2 + $0xa8] sm:$0xff]
      %v289 = vld [vmem:[#allocation2 + $0xb0] sm:$0xff]
      %v290 = vld [vmem:[#allocation2 + $0xb8] sm:$0xff]
      %v291 = vld [vmem:[#allocation2 + $0xc0] sm:$0xff]
      %v292 = vld [vmem:[#allocation2 + $0xc8] sm:$0xff]
      %v293 = vld [vmem:[#allocation2 + $0xd0] sm:$0xff]
      %v294 = vld [vmem:[#allocation2 + $0xd8] sm:$0xff]
      %v295 = vld [vmem:[#allocation2 + $0xe0] sm:$0xff]
      %v296 = vld [vmem:[#allocation2 + $0xe8] sm:$0xff]
      %v297 = vld [vmem:[#allocation2 + $0xf0] sm:$0xff]
      %v298 = vld [vmem:[#allocation2 + $0xf8] sm:$0xff]
      %v299 = vld [vmem:[%s212] sm:$0xff]
      %v300 = vld [vmem:[%s212 + $0x8] sm:$0xff]
      %v301 = vld [vmem:[%s212 + $0x10] sm:$0xff]
      %v302 = vld [vmem:[%s212 + $0x18] sm:$0xff]
      %v303 = vld [vmem:[%s212 + $0x20] sm:$0xff]
      %v304 = vld [vmem:[%s212 + $0x28] sm:$0xff]
      %v305 = vld [vmem:[%s212 + $0x30] sm:$0xff]
      %v306 = vld [vmem:[%s212 + $0x38] sm:$0xff]
      %v307 = vld [vmem:[%s212 + $0x40] sm:$0xff]
      %v308 = vld [vmem:[%s212 + $0x48] sm:$0xff]
      %v309 = vld [vmem:[%s212 + $0x50] sm:$0xff]
      %v310 = vld [vmem:[%s212 + $0x58] sm:$0xff]
      %v311 = vld [vmem:[%s212 + $0x60] sm:$0xff]
      %v312 = vld [vmem:[%s212 + $0x68] sm:$0xff]
      %v313 = vld [vmem:[%s212 + $0x70] sm:$0xff]
      %v314 = vld [vmem:[%s212 + $0x78] sm:$0xff]
      %v315 = vld [vmem:[%s212 + $0x80] sm:$0xff]
      %v316 = vld [vmem:[%s212 + $0x88] sm:$0xff]
      %v317 = vld [vmem:[%s212 + $0x90] sm:$0xff]
      %v318 = vld [vmem:[%s212 + $0x98] sm:$0xff]
      %v319 = vld [vmem:[%s212 + $0xa0] sm:$0xff]
      %v320 = vld [vmem:[%s212 + $0xa8] sm:$0xff]
      %v321 = vld [vmem:[%s212 + $0xb0] sm:$0xff]
      %v322 = vld [vmem:[%s212 + $0xb8] sm:$0xff]
      %v323 = vld [vmem:[%s212 + $0xc0] sm:$0xff]
      %v324 = vld [vmem:[%s212 + $0xc8] sm:$0xff]
      %v325 = vld [vmem:[%s212 + $0xd0] sm:$0xff]
      %v326 = vld [vmem:[%s212 + $0xd8] sm:$0xff]
      %v327 = vld [vmem:[%s212 + $0xe0] sm:$0xff]
      %v328 = vld [vmem:[%s212 + $0xe8] sm:$0xff]
      %v329 = vld [vmem:[%s212 + $0xf0] sm:$0xff]
      %v330 = vld [vmem:[%s212 + $0xf8] sm:$0xff]
      %v331 = vld [vmem:[%s218] sm:$0xff]
      %v332 = vld [vmem:[%s218 + $0x8] sm:$0xff]
      %v333 = vld [vmem:[%s218 + $0x10] sm:$0xff]
      %v334 = vld [vmem:[%s218 + $0x18] sm:$0xff]
      %v335 = vld [vmem:[%s218 + $0x20] sm:$0xf]
      %vm336 = vcmask 293888
      %v338 = vsel %vm336, %v299, 0
      %v341 = vsel %vm336, %v300, 0
      %v344 = vsel %vm336, %v301, 0
      %v347 = vsel %vm336, %v302, 0
      %v350 = vsel %vm336, %v303, 0
      %v353 = vsel %vm336, %v304, 0
      %v356 = vsel %vm336, %v305, 0
      %v359 = vsel %vm336, %v306, 0
      %v362 = vsel %vm336, %v307, 0
      %v365 = vsel %vm336, %v308, 0
      %v368 = vsel %vm336, %v309, 0
      %v371 = vsel %vm336, %v310, 0
      %v374 = vsel %vm336, %v311, 0
      %v377 = vsel %vm336, %v312, 0
      %v380 = vsel %vm336, %v313, 0
      %v383 = vsel %vm336, %v314, 0
      %v386 = vsel %vm336, %v315, 0
      %v389 = vsel %vm336, %v316, 0
      %v392 = vsel %vm336, %v317, 0
      %v395 = vsel %vm336, %v318, 0
      %v398 = vsel %vm336, %v319, 0
      %v401 = vsel %vm336, %v320, 0
      %v404 = vsel %vm336, %v321, 0
      %v407 = vsel %vm336, %v322, 0
      %v410 = vsel %vm336, %v323, 0
      %v413 = vsel %vm336, %v324, 0
      %v416 = vsel %vm336, %v325, 0
      %v419 = vsel %vm336, %v326, 0
      %v422 = vsel %vm336, %v327, 0
      %v425 = vsel %vm336, %v328, 0
      %v428 = vsel %vm336, %v329, 0
      %v431 = vsel %vm336, %v330, 0
      %vm433 = vcmask 1043456
      %v435 = vsel %vm433, %v335, 0
      %437 = vmatprep.subr.mxu0 0.0
      %438 = vmatpush1.msra.mxu0 0.0
      %439 = vmatprep.subr.mxu0 0.0
      %440 = vmatpush1.msra.mxu0 0.0
      %441 = vmatprep.subr.mxu0 0.0
      %442 = vmatpush1.msra.mxu0 0.0
      %443 = vmatprep.subr.mxu0 0.0
      %444 = vmatpush1.msra.mxu0 0.0
      %445 = vmatprep.subr.mxu0 0.0
      %446 = vmatpush1.msra.mxu0 0.0
      %447 = vmatprep.subr.mxu0 0.0
      %448 = vmatpush1.msra.mxu0 0.0
      %449 = vmatprep.subr.mxu0 0.0
      %450 = vmatpush1.msra.mxu0 0.0
      %451 = vmatprep.subr.mxu0 0.0
      %452 = vmatpush1.msra.mxu0 0.0
      %453 = vmatprep.subr.mxu0 0.0
      %454 = vmatpush1.msra.mxu0 0.0
      %455 = vmatprep.subr.mxu0 0.0
      %456 = vmatpush1.msra.mxu0 0.0
      %457 = vmatprep.subr.mxu0 0.0
      %458 = vmatpush1.msra.mxu0 0.0
      %459 = vmatprep.subr.mxu0 0.0
      %460 = vmatpush1.msra.mxu0 %v435
      %461 = vmatprep.subr.mxu0 0.0
      %462 = vmatpush1.msra.mxu0 %v334
      %463 = vmatprep.subr.mxu0 0.0
      %464 = vmatpush1.msra.mxu0 %v333
      %465 = vmatprep.subr.mxu0 0.0
      %466 = vmatpush1.msra.mxu0 %v332
      %467 = vmatprep.subr.mxu0 0.0
      %468 = vmatpush1.msra.mxu0 %v331
      %469 = vmatprep.subr.mxu0 0.0
      %470 = vmatpush2.msra.mxu0 0.0
      %471 = vmatprep.subr.mxu0 0.0
      %472 = vmatpush2.msra.mxu0 0.0
      %473 = vmatprep.subr.mxu0 0.0
      %474 = vmatpush2.msra.mxu0 0.0
      %475 = vmatprep.subr.mxu0 0.0
      %476 = vmatpush2.msra.mxu0 0.0
      %477 = vmatprep.subr.mxu0 0.0
      %478 = vmatpush2.msra.mxu0 0.0
      %479 = vmatprep.subr.mxu0 0.0
      %480 = vmatpush2.msra.mxu0 0.0
      %481 = vmatprep.subr.mxu0 0.0
      %482 = vmatpush2.msra.mxu0 0.0
      %483 = vmatprep.subr.mxu0 0.0
      %484 = vmatpush2.msra.mxu0 0.0
      %485 = vmatprep.subr.mxu0 0.0
      %486 = vmatpush2.msra.mxu0 0.0
      %487 = vmatprep.subr.mxu0 0.0
      %488 = vmatpush2.msra.mxu0 0.0
      %489 = vmatprep.subr.mxu0 0.0
      %490 = vmatpush2.msra.mxu0 0.0
      %491 = vmatprep.subr.mxu0 0.0
      %492 = vmatpush2.msra.mxu0 0.0
      %493 = vmatprep.subr.mxu0 0.0
      %494 = vmatpush2.msra.mxu0 0.0
      %495 = vmatprep.subr.mxu0 0.0
      %496 = vmatpush2.msra.mxu0 0.0
      %497 = vmatprep.subr.mxu0 0.0
      %498 = vmatpush2.msra.mxu0 0.0
      %499 = vmatprep.subr.mxu0 0.0
      %500 = vmatpush2.msra.mxu0 0.0
      %501 = vmatprep.mubr.f32.mxu0 0.0
      %502 = vmatmul.mubr.f32.gmra.mxu0 %v338
      %v503 = vpop.f32.mrf.mxu0
      %v504 = vadd.f32 0.0, %v503
      %v505 = vpop.f32.mrf.mxu0
      %506 = vmatprep.mubr.f32.mxu0 0.0
      %507 = vmatmul.mubr.f32.gmra.mxu0 %v341
      %v508 = vpop.f32.mrf.mxu0
      %v509 = vadd.f32 0.0, %v508
      %v510 = vpop.f32.mrf.mxu0
      %511 = vmatprep.mubr.f32.mxu0 0.0
      %512 = vmatmul.mubr.f32.gmra.mxu0 %v344
      %v513 = vpop.f32.mrf.mxu0
      %v514 = vadd.f32 0.0, %v513
      %v515 = vpop.f32.mrf.mxu0
      %516 = vmatprep.mubr.f32.mxu0 0.0
      %517 = vmatmul.mubr.f32.gmra.mxu0 %v347
      %v518 = vpop.f32.mrf.mxu0
      %v519 = vadd.f32 0.0, %v518
      %v520 = vpop.f32.mrf.mxu0
      %521 = vmatprep.mubr.f32.mxu0 0.0
      %522 = vmatmul.mubr.f32.gmra.mxu0 %v350
      %v523 = vpop.f32.mrf.mxu0
      %v524 = vadd.f32 0.0, %v523
      %v525 = vpop.f32.mrf.mxu0
      %526 = vmatprep.mubr.f32.mxu0 0.0
      %527 = vmatmul.mubr.f32.gmra.mxu0 %v353
      %v528 = vpop.f32.mrf.mxu0
      %v529 = vadd.f32 0.0, %v528
      %v530 = vpop.f32.mrf.mxu0
      %531 = vmatprep.mubr.f32.mxu0 0.0
      %532 = vmatmul.mubr.f32.gmra.mxu0 %v356
      %v533 = vpop.f32.mrf.mxu0
      %v534 = vadd.f32 0.0, %v533
      %v535 = vpop.f32.mrf.mxu0
      %536 = vmatprep.mubr.f32.mxu0 0.0
      %537 = vmatmul.mubr.f32.gmra.mxu0 %v359
      %v538 = vpop.f32.mrf.mxu0
      %v539 = vadd.f32 0.0, %v538
      %v540 = vpop.f32.mrf.mxu0
      %541 = vmatprep.mubr.f32.mxu0 0.0
      %542 = vmatmul.mubr.f32.gmra.mxu0 %v362
      %v543 = vpop.f32.mrf.mxu0
      %v544 = vadd.f32 0.0, %v543
      %v545 = vpop.f32.mrf.mxu0
      %546 = vmatprep.mubr.f32.mxu0 0.0
      %547 = vmatmul.mubr.f32.gmra.mxu0 %v365
      %v548 = vpop.f32.mrf.mxu0
      %v549 = vadd.f32 0.0, %v548
      %v550 = vpop.f32.mrf.mxu0
      %551 = vmatprep.mubr.f32.mxu0 0.0
      %552 = vmatmul.mubr.f32.gmra.mxu0 %v368
      %v553 = vpop.f32.mrf.mxu0
      %v554 = vadd.f32 0.0, %v553
      %v555 = vpop.f32.mrf.mxu0
      %556 = vmatprep.mubr.f32.mxu0 0.0
      %557 = vmatmul.mubr.f32.gmra.mxu0 %v371
      %v558 = vpop.f32.mrf.mxu0
      %v559 = vadd.f32 0.0, %v558
      %v560 = vpop.f32.mrf.mxu0
      %561 = vmatprep.mubr.f32.mxu0 0.0
      %562 = vmatmul.mubr.f32.gmra.mxu0 %v374
      %v563 = vpop.f32.mrf.mxu0
      %v564 = vadd.f32 0.0, %v563
      %v565 = vpop.f32.mrf.mxu0
      %566 = vmatprep.mubr.f32.mxu0 0.0
      %567 = vmatmul.mubr.f32.gmra.mxu0 %v377
      %v568 = vpop.f32.mrf.mxu0
      %v569 = vadd.f32 0.0, %v568
      %v570 = vpop.f32.mrf.mxu0
      %571 = vmatprep.mubr.f32.mxu0 0.0
      %572 = vmatmul.mubr.f32.gmra.mxu0 %v380
      %v573 = vpop.f32.mrf.mxu0
      %v574 = vadd.f32 0.0, %v573
      %v575 = vpop.f32.mrf.mxu0
      %576 = vmatprep.mubr.f32.mxu0 0.0
      %577 = vmatmul.mubr.f32.gmra.mxu0 %v383
      %v578 = vpop.f32.mrf.mxu0
      %v579 = vadd.f32 0.0, %v578
      %v580 = vpop.f32.mrf.mxu0
      %581 = vmatprep.mubr.f32.mxu0 0.0
      %582 = vmatmul.mubr.f32.gmra.mxu0 %v386
      %v583 = vpop.f32.mrf.mxu0
      %v584 = vadd.f32 0.0, %v583
      %v585 = vpop.f32.mrf.mxu0
      %586 = vmatprep.mubr.f32.mxu0 0.0
      %587 = vmatmul.mubr.f32.gmra.mxu0 %v389
      %v588 = vpop.f32.mrf.mxu0
      %v589 = vadd.f32 0.0, %v588
      %v590 = vpop.f32.mrf.mxu0
      %591 = vmatprep.mubr.f32.mxu0 0.0
      %592 = vmatmul.mubr.f32.gmra.mxu0 %v392
      %v593 = vpop.f32.mrf.mxu0
      %v594 = vadd.f32 0.0, %v593
      %v595 = vpop.f32.mrf.mxu0
      %596 = vmatprep.mubr.f32.mxu0 0.0
      %597 = vmatmul.mubr.f32.gmra.mxu0 %v395
      %v598 = vpop.f32.mrf.mxu0
      %v599 = vadd.f32 0.0, %v598
      %v600 = vpop.f32.mrf.mxu0
      %601 = vmatprep.mubr.f32.mxu0 0.0
      %602 = vmatmul.mubr.f32.gmra.mxu0 %v398
      %v603 = vpop.f32.mrf.mxu0
      %v604 = vadd.f32 0.0, %v603
      %v605 = vpop.f32.mrf.mxu0
      %606 = vmatprep.mubr.f32.mxu0 0.0
      %607 = vmatmul.mubr.f32.gmra.mxu0 %v401
      %v608 = vpop.f32.mrf.mxu0
      %v609 = vadd.f32 0.0, %v608
      %v610 = vpop.f32.mrf.mxu0
      %611 = vmatprep.mubr.f32.mxu0 0.0
      %612 = vmatmul.mubr.f32.gmra.mxu0 %v404
      %v613 = vpop.f32.mrf.mxu0
      %v614 = vadd.f32 0.0, %v613
      %v615 = vpop.f32.mrf.mxu0
      %616 = vmatprep.mubr.f32.mxu0 0.0
      %617 = vmatmul.mubr.f32.gmra.mxu0 %v407
      %v618 = vpop.f32.mrf.mxu0
      %v619 = vadd.f32 0.0, %v618
      %v620 = vpop.f32.mrf.mxu0
      %621 = vmatprep.mubr.f32.mxu0 0.0
      %622 = vmatmul.mubr.f32.gmra.mxu0 %v410
      %v623 = vpop.f32.mrf.mxu0
      %v624 = vadd.f32 0.0, %v623
      %v625 = vpop.f32.mrf.mxu0
      %626 = vmatprep.mubr.f32.mxu0 0.0
      %627 = vmatmul.mubr.f32.gmra.mxu0 %v413
      %v628 = vpop.f32.mrf.mxu0
      %v629 = vadd.f32 0.0, %v628
      %v630 = vpop.f32.mrf.mxu0
      %631 = vmatprep.mubr.f32.mxu0 0.0
      %632 = vmatmul.mubr.f32.gmra.mxu0 %v416
      %v633 = vpop.f32.mrf.mxu0
      %v634 = vadd.f32 0.0, %v633
      %v635 = vpop.f32.mrf.mxu0
      %636 = vmatprep.mubr.f32.mxu0 0.0
      %637 = vmatmul.mubr.f32.gmra.mxu0 %v419
      %v638 = vpop.f32.mrf.mxu0
      %v639 = vadd.f32 0.0, %v638
      %v640 = vpop.f32.mrf.mxu0
      %641 = vmatprep.mubr.f32.mxu0 0.0
      %642 = vmatmul.mubr.f32.gmra.mxu0 %v422
      %v643 = vpop.f32.mrf.mxu0
      %v644 = vadd.f32 0.0, %v643
      %v645 = vpop.f32.mrf.mxu0
      %646 = vmatprep.mubr.f32.mxu0 0.0
      %647 = vmatmul.mubr.f32.gmra.mxu0 %v425
      %v648 = vpop.f32.mrf.mxu0
      %v649 = vadd.f32 0.0, %v648
      %v650 = vpop.f32.mrf.mxu0
      %651 = vmatprep.mubr.f32.mxu0 0.0
      %652 = vmatmul.mubr.f32.gmra.mxu0 %v428
      %v653 = vpop.f32.mrf.mxu0
      %v654 = vadd.f32 0.0, %v653
      %v655 = vpop.f32.mrf.mxu0
      %656 = vmatprep.mubr.f32.mxu0 0.0
      %657 = vmatmul.mubr.f32.gmra.mxu0 %v431
      %v658 = vpop.f32.mrf.mxu0
      %v659 = vadd.f32 0.0, %v658
      %v660 = vpop.f32.mrf.mxu0
      %661 = vdwg.mxu0
      %v662 = vadd.f32 %v267, %v504
      %v663 = vadd.f32 %v268, %v509
      %v664 = vadd.f32 %v269, %v514
      %v665 = vadd.f32 %v270, %v519
      %v666 = vadd.f32 %v271, %v524
      %v667 = vadd.f32 %v272, %v529
      %v668 = vadd.f32 %v273, %v534
      %v669 = vadd.f32 %v274, %v539
      %v670 = vadd.f32 %v275, %v544
      %v671 = vadd.f32 %v276, %v549
      %v672 = vadd.f32 %v277, %v554
      %v673 = vadd.f32 %v278, %v559
      %v674 = vadd.f32 %v279, %v564
      %v675 = vadd.f32 %v280, %v569
      %v676 = vadd.f32 %v281, %v574
      %v677 = vadd.f32 %v282, %v579
      %v678 = vadd.f32 %v283, %v584
      %v679 = vadd.f32 %v284, %v589
      %v680 = vadd.f32 %v285, %v594
      %v681 = vadd.f32 %v286, %v599
      %v682 = vadd.f32 %v287, %v604
      %v683 = vadd.f32 %v288, %v609
      %v684 = vadd.f32 %v289, %v614
      %v685 = vadd.f32 %v290, %v619
      %v686 = vadd.f32 %v291, %v624
      %v687 = vadd.f32 %v292, %v629
      %v688 = vadd.f32 %v293, %v634
      %v689 = vadd.f32 %v294, %v639
      %v690 = vadd.f32 %v295, %v644
      %v691 = vadd.f32 %v296, %v649
      %v692 = vadd.f32 %v297, %v654
      %v693 = vadd.f32 %v298, %v659
      %vm694 = vcmask 31744
      %695 = vst.msk [vmem:[#allocation2] sm:$0xff] %vm694, %v662
      %696 = vst.msk [vmem:[#allocation2 + $0x8] sm:$0xff] %vm694, %v663
      %697 = vst.msk [vmem:[#allocation2 + $0x10] sm:$0xff] %vm694, %v664
      %698 = vst.msk [vmem:[#allocation2 + $0x18] sm:$0xff] %vm694, %v665
      %699 = vst.msk [vmem:[#allocation2 + $0x20] sm:$0xff] %vm694, %v666
      %700 = vst.msk [vmem:[#allocation2 + $0x28] sm:$0xff] %vm694, %v667
      %701 = vst.msk [vmem:[#allocation2 + $0x30] sm:$0xff] %vm694, %v668
      %702 = vst.msk [vmem:[#allocation2 + $0x38] sm:$0xff] %vm694, %v669
      %703 = vst.msk [vmem:[#allocation2 + $0x40] sm:$0xff] %vm694, %v670
      %704 = vst.msk [vmem:[#allocation2 + $0x48] sm:$0xff] %vm694, %v671
      %705 = vst.msk [vmem:[#allocation2 + $0x50] sm:$0xff] %vm694, %v672
      %706 = vst.msk [vmem:[#allocation2 + $0x58] sm:$0xff] %vm694, %v673
      %707 = vst.msk [vmem:[#allocation2 + $0x60] sm:$0xff] %vm694, %v674
      %708 = vst.msk [vmem:[#allocation2 + $0x68] sm:$0xff] %vm694, %v675
      %709 = vst.msk [vmem:[#allocation2 + $0x70] sm:$0xff] %vm694, %v676
      %710 = vst.msk [vmem:[#allocation2 + $0x78] sm:$0xff] %vm694, %v677
      %711 = vst.msk [vmem:[#allocation2 + $0x80] sm:$0xff] %vm694, %v678
      %712 = vst.msk [vmem:[#allocation2 + $0x88] sm:$0xff] %vm694, %v679
      %713 = vst.msk [vmem:[#allocation2 + $0x90] sm:$0xff] %vm694, %v680
      %714 = vst.msk [vmem:[#allocation2 + $0x98] sm:$0xff] %vm694, %v681
      %715 = vst.msk [vmem:[#allocation2 + $0xa0] sm:$0xff] %vm694, %v682
      %716 = vst.msk [vmem:[#allocation2 + $0xa8] sm:$0xff] %vm694, %v683
      %717 = vst.msk [vmem:[#allocation2 + $0xb0] sm:$0xff] %vm694, %v684
      %718 = vst.msk [vmem:[#allocation2 + $0xb8] sm:$0xff] %vm694, %v685
      %719 = vst.msk [vmem:[#allocation2 + $0xc0] sm:$0xff] %vm694, %v686
      %720 = vst.msk [vmem:[#allocation2 + $0xc8] sm:$0xff] %vm694, %v687
      %721 = vst.msk [vmem:[#allocation2 + $0xd0] sm:$0xff] %vm694, %v688
      %722 = vst.msk [vmem:[#allocation2 + $0xd8] sm:$0xff] %vm694, %v689
      %723 = vst.msk [vmem:[#allocation2 + $0xe0] sm:$0xff] %vm694, %v690
      %724 = vst.msk [vmem:[#allocation2 + $0xe8] sm:$0xff] %vm694, %v691
      %725 = vst.msk [vmem:[#allocation2 + $0xf0] sm:$0xff] %vm694, %v692
      %726 = vst.msk [vmem:[#allocation2 + $0xf8] sm:$0xff] %vm694, %v693
      // Predicated region
      $region33: #{residual_forward.4} parent=27 // pred_check
        %p727 = pneg %p230
      $region34: #{residual_forward.4} parent=27 // pred_check_branch
        %729 = sbr.rel (%p727) target = $region36
      $region35: #{residual_forward.4} parent=27 // pred_region
        %v730 = vld [vmem:[#allocation2] sm:$0xff]
        %v731 = vld [vmem:[#allocation2 + $0x8] sm:$0xff]
        %v732 = vld [vmem:[#allocation2 + $0x10] sm:$0xff]
        %v733 = vld [vmem:[#allocation2 + $0x18] sm:$0xff]
        %v734 = vld [vmem:[#allocation2 + $0x20] sm:$0xff]
        %v735 = vld [vmem:[#allocation2 + $0x28] sm:$0xff]
        %v736 = vld [vmem:[#allocation2 + $0x30] sm:$0xff]
        %v737 = vld [vmem:[#allocation2 + $0x38] sm:$0xff]
        %v738 = vld [vmem:[#allocation2 + $0x40] sm:$0xff]
        %v739 = vld [vmem:[#allocation2 + $0x48] sm:$0xff]
        %v740 = vld [vmem:[#allocation2 + $0x50] sm:$0xff]
        %v741 = vld [vmem:[#allocation2 + $0x58] sm:$0xff]
        %v742 = vld [vmem:[#allocation2 + $0x60] sm:$0xff]
        %v743 = vld [vmem:[#allocation2 + $0x68] sm:$0xff]
        %v744 = vld [vmem:[#allocation2 + $0x70] sm:$0xff]
        %v745 = vld [vmem:[#allocation2 + $0x78] sm:$0xff]
        %v746 = vld [vmem:[#allocation2 + $0x80] sm:$0xff]
        %v747 = vld [vmem:[#allocation2 + $0x88] sm:$0xff]
        %v748 = vld [vmem:[#allocation2 + $0x90] sm:$0xff]
        %v749 = vld [vmem:[#allocation2 + $0x98] sm:$0xff]
        %v750 = vld [vmem:[#allocation2 + $0xa0] sm:$0xff]
        %v751 = vld [vmem:[#allocation2 + $0xa8] sm:$0xff]
        %v752 = vld [vmem:[#allocation2 + $0xb0] sm:$0xff]
        %v753 = vld [vmem:[#allocation2 + $0xb8] sm:$0xff]
        %v754 = vld [vmem:[#allocation2 + $0xc0] sm:$0xff]
        %v755 = vld [vmem:[#allocation2 + $0xc8] sm:$0xff]
        %v756 = vld [vmem:[#allocation2 + $0xd0] sm:$0xff]
        %v757 = vld [vmem:[#allocation2 + $0xd8] sm:$0xff]
        %v758 = vld [vmem:[#allocation2 + $0xe0] sm:$0xff]
        %v759 = vld [vmem:[#allocation2 + $0xe8] sm:$0xff]
        %v760 = vld [vmem:[#allocation2 + $0xf0] sm:$0xff]
        %v761 = vld [vmem:[#allocation2 + $0xf8] sm:$0xff]
        %762 = vst.msk [vmem:[%s224] sm:$0xff] %vm694, %v730
        %763 = vst.msk [vmem:[%s224 + $0x8] sm:$0xff] %vm694, %v731
        %764 = vst.msk [vmem:[%s224 + $0x10] sm:$0xff] %vm694, %v732
        %765 = vst.msk [vmem:[%s224 + $0x18] sm:$0xff] %vm694, %v733
        %766 = vst.msk [vmem:[%s224 + $0x20] sm:$0xff] %vm694, %v734
        %767 = vst.msk [vmem:[%s224 + $0x28] sm:$0xff] %vm694, %v735
        %768 = vst.msk [vmem:[%s224 + $0x30] sm:$0xff] %vm694, %v736
        %769 = vst.msk [vmem:[%s224 + $0x38] sm:$0xff] %vm694, %v737
        %770 = vst.msk [vmem:[%s224 + $0x40] sm:$0xff] %vm694, %v738
        %771 = vst.msk [vmem:[%s224 + $0x48] sm:$0xff] %vm694, %v739
        %772 = vst.msk [vmem:[%s224 + $0x50] sm:$0xff] %vm694, %v740
        %773 = vst.msk [vmem:[%s224 + $0x58] sm:$0xff] %vm694, %v741
        %774 = vst.msk [vmem:[%s224 + $0x60] sm:$0xff] %vm694, %v742
        %775 = vst.msk [vmem:[%s224 + $0x68] sm:$0xff] %vm694, %v743
        %776 = vst.msk [vmem:[%s224 + $0x70] sm:$0xff] %vm694, %v744
        %777 = vst.msk [vmem:[%s224 + $0x78] sm:$0xff] %vm694, %v745
        %778 = vst.msk [vmem:[%s224 + $0x80] sm:$0xff] %vm694, %v746
        %779 = vst.msk [vmem:[%s224 + $0x88] sm:$0xff] %vm694, %v747
        %780 = vst.msk [vmem:[%s224 + $0x90] sm:$0xff] %vm694, %v748
        %781 = vst.msk [vmem:[%s224 + $0x98] sm:$0xff] %vm694, %v749
        %782 = vst.msk [vmem:[%s224 + $0xa0] sm:$0xff] %vm694, %v750
        %783 = vst.msk [vmem:[%s224 + $0xa8] sm:$0xff] %vm694, %v751
        %784 = vst.msk [vmem:[%s224 + $0xb0] sm:$0xff] %vm694, %v752
        %785 = vst.msk [vmem:[%s224 + $0xb8] sm:$0xff] %vm694, %v753
        %786 = vst.msk [vmem:[%s224 + $0xc0] sm:$0xff] %vm694, %v754
        %787 = vst.msk [vmem:[%s224 + $0xc8] sm:$0xff] %vm694, %v755
        %788 = vst.msk [vmem:[%s224 + $0xd0] sm:$0xff] %vm694, %v756
        %789 = vst.msk [vmem:[%s224 + $0xd8] sm:$0xff] %vm694, %v757
        %790 = vst.msk [vmem:[%s224 + $0xe0] sm:$0xff] %vm694, %v758
        %791 = vst.msk [vmem:[%s224 + $0xe8] sm:$0xff] %vm694, %v759
        %792 = vst.msk [vmem:[%s224 + $0xf0] sm:$0xff] %vm694, %v760
        %793 = vst.msk [vmem:[%s224 + $0xf8] sm:$0xff] %vm694, %v761
        %v794 = vsel %vm694, %v730, 0.0
        %v795 = vsel %vm694, %v731, 0.0
        %v796 = vadd.f32 %v794, %v795
        %v797 = vsel %vm694, %v732, 0.0
        %v798 = vadd.f32 %v796, %v797
        %v799 = vsel %vm694, %v733, 0.0
        %v800 = vadd.f32 %v798, %v799
        %v801 = vsel %vm694, %v734, 0.0
        %v802 = vadd.f32 %v800, %v801
        %v803 = vsel %vm694, %v735, 0.0
        %v804 = vadd.f32 %v802, %v803
        %v805 = vsel %vm694, %v736, 0.0
        %v806 = vadd.f32 %v804, %v805
        %v807 = vsel %vm694, %v737, 0.0
        %v808 = vadd.f32 %v806, %v807
        %v809 = vsel %vm694, %v738, 0.0
        %v810 = vadd.f32 %v808, %v809
        %v811 = vsel %vm694, %v739, 0.0
        %v812 = vadd.f32 %v810, %v811
        %v813 = vsel %vm694, %v740, 0.0
        %v814 = vadd.f32 %v812, %v813
        %v815 = vsel %vm694, %v741, 0.0
        %v816 = vadd.f32 %v814, %v815
        %v817 = vsel %vm694, %v742, 0.0
        %v818 = vadd.f32 %v816, %v817
        %v819 = vsel %vm694, %v743, 0.0
        %v820 = vadd.f32 %v818, %v819
        %v821 = vsel %vm694, %v744, 0.0
        %v822 = vadd.f32 %v820, %v821
        %v823 = vsel %vm694, %v745, 0.0
        %v824 = vadd.f32 %v822, %v823
        %v825 = vsel %vm694, %v746, 0.0
        %v826 = vadd.f32 %v824, %v825
        %v827 = vsel %vm694, %v747, 0.0
        %v828 = vadd.f32 %v826, %v827
        %v829 = vsel %vm694, %v748, 0.0
        %v830 = vadd.f32 %v828, %v829
        %v831 = vsel %vm694, %v749, 0.0
        %v832 = vadd.f32 %v830, %v831
        %v833 = vsel %vm694, %v750, 0.0
        %v834 = vadd.f32 %v832, %v833
        %v835 = vsel %vm694, %v751, 0.0
        %v836 = vadd.f32 %v834, %v835
        %v837 = vsel %vm694, %v752, 0.0
        %v838 = vadd.f32 %v836, %v837
        %v839 = vsel %vm694, %v753, 0.0
        %v840 = vadd.f32 %v838, %v839
        %v841 = vsel %vm694, %v754, 0.0
        %v842 = vadd.f32 %v840, %v841
        %v843 = vsel %vm694, %v755, 0.0
        %v844 = vadd.f32 %v842, %v843
        %v845 = vsel %vm694, %v756, 0.0
        %v846 = vadd.f32 %v844, %v845
        %v847 = vsel %vm694, %v757, 0.0
        %v848 = vadd.f32 %v846, %v847
        %v849 = vsel %vm694, %v758, 0.0
        %v850 = vadd.f32 %v848, %v849
        %v851 = vsel %vm694, %v759, 0.0
        %v852 = vadd.f32 %v850, %v851
        %v853 = vsel %vm694, %v760, 0.0
        %v854 = vadd.f32 %v852, %v853
        %v855 = vsel %vm694, %v761, 0.0
        %v856 = vadd.f32 %v854, %v855
        %v857 = vrot.slane %v856, 4
        %v858 = vadd.f32 %v856, %v857
        %v859 = vrot.slane %v858, 2
        %v860 = vadd.f32 %v858, %v859
        %v861 = vrot.slane %v860, 1
        %v862 = vadd.f32 %v860, %v861
        %vm863 = vcmask 24576
        %864 = vst.msk [vmem:[%s229] sm:$0x1] %vm863, %v862
        %v865 = vmul.f32 %v730, %v730
        %v866 = vmul.f32 %v731, %v731
        %v867 = vmul.f32 %v732, %v732
        %v868 = vmul.f32 %v733, %v733
        %v869 = vmul.f32 %v734, %v734
        %v870 = vmul.f32 %v735, %v735
        %v871 = vmul.f32 %v736, %v736
        %v872 = vmul.f32 %v737, %v737
        %v873 = vmul.f32 %v738, %v738
        %v874 = vmul.f32 %v739, %v739
        %v875 = vmul.f32 %v740, %v740
        %v876 = vmul.f32 %v741, %v741
        %v877 = vmul.f32 %v742, %v742
        %v878 = vmul.f32 %v743, %v743
        %v879 = vmul.f32 %v744, %v744
        %v880 = vmul.f32 %v745, %v745
        %v881 = vmul.f32 %v746, %v746
        %v882 = vmul.f32 %v747, %v747
        %v883 = vmul.f32 %v748, %v748
        %v884 = vmul.f32 %v749, %v749
        %v885 = vmul.f32 %v750, %v750
        %v886 = vmul.f32 %v751, %v751
        %v887 = vmul.f32 %v752, %v752
        %v888 = vmul.f32 %v753, %v753
        %v889 = vmul.f32 %v754, %v754
        %v890 = vmul.f32 %v755, %v755
        %v891 = vmul.f32 %v756, %v756
        %v892 = vmul.f32 %v757, %v757
        %v893 = vmul.f32 %v758, %v758
        %v894 = vmul.f32 %v759, %v759
        %v895 = vmul.f32 %v760, %v760
        %v896 = vmul.f32 %v761, %v761
        %v897 = vsel %vm694, %v865, 0.0
        %v898 = vsel %vm694, %v866, 0.0
        %v899 = vadd.f32 %v897, %v898
        %v900 = vsel %vm694, %v867, 0.0
        %v901 = vadd.f32 %v899, %v900
        %v902 = vsel %vm694, %v868, 0.0
        %v903 = vadd.f32 %v901, %v902
        %v904 = vsel %vm694, %v869, 0.0
        %v905 = vadd.f32 %v903, %v904
        %v906 = vsel %vm694, %v870, 0.0
        %v907 = vadd.f32 %v905, %v906
        %v908 = vsel %vm694, %v871, 0.0
        %v909 = vadd.f32 %v907, %v908
        %v910 = vsel %vm694, %v872, 0.0
        %v911 = vadd.f32 %v909, %v910
        %v912 = vsel %vm694, %v873, 0.0
        %v913 = vadd.f32 %v911, %v912
        %v914 = vsel %vm694, %v874, 0.0
        %v915 = vadd.f32 %v913, %v914
        %v916 = vsel %vm694, %v875, 0.0
        %v917 = vadd.f32 %v915, %v916
        %v918 = vsel %vm694, %v876, 0.0
        %v919 = vadd.f32 %v917, %v918
        %v920 = vsel %vm694, %v877, 0.0
        %v921 = vadd.f32 %v919, %v920
        %v922 = vsel %vm694, %v878, 0.0
        %v923 = vadd.f32 %v921, %v922
        %v924 = vsel %vm694, %v879, 0.0
        %v925 = vadd.f32 %v923, %v924
        %v926 = vsel %vm694, %v880, 0.0
        %v927 = vadd.f32 %v925, %v926
        %v928 = vsel %vm694, %v881, 0.0
        %v929 = vadd.f32 %v927, %v928
        %v930 = vsel %vm694, %v882, 0.0
        %v931 = vadd.f32 %v929, %v930
        %v932 = vsel %vm694, %v883, 0.0
        %v933 = vadd.f32 %v931, %v932
        %v934 = vsel %vm694, %v884, 0.0
        %v935 = vadd.f32 %v933, %v934
        %v936 = vsel %vm694, %v885, 0.0
        %v937 = vadd.f32 %v935, %v936
        %v938 = vsel %vm694, %v886, 0.0
        %v939 = vadd.f32 %v937, %v938
        %v940 = vsel %vm694, %v887, 0.0
        %v941 = vadd.f32 %v939, %v940
        %v942 = vsel %vm694, %v888, 0.0
        %v943 = vadd.f32 %v941, %v942
        %v944 = vsel %vm694, %v889, 0.0
        %v945 = vadd.f32 %v943, %v944
        %v946 = vsel %vm694, %v890, 0.0
        %v947 = vadd.f32 %v945, %v946
        %v948 = vsel %vm694, %v891, 0.0
        %v949 = vadd.f32 %v947, %v948
        %v950 = vsel %vm694, %v892, 0.0
        %v951 = vadd.f32 %v949, %v950
        %v952 = vsel %vm694, %v893, 0.0
        %v953 = vadd.f32 %v951, %v952
        %v954 = vsel %vm694, %v894, 0.0
        %v955 = vadd.f32 %v953, %v954
        %v956 = vsel %vm694, %v895, 0.0
        %v957 = vadd.f32 %v955, %v956
        %v958 = vsel %vm694, %v896, 0.0
        %v959 = vadd.f32 %v957, %v958
        %v960 = vrot.slane %v959, 4
        %v961 = vadd.f32 %v959, %v960
        %v962 = vrot.slane %v961, 2
        %v963 = vadd.f32 %v961, %v962
        %v964 = vrot.slane %v963, 1
        %v965 = vadd.f32 %v963, %v964
        %966 = vst.msk [vmem:[%s229 + $0x1] sm:$0x1] %vm863, %v965
      $region36: #{residual_forward.4} parent=27 // pred_fallthru
        _
      %s967 = smul.u32 32, %s19
      %p968 = scmp.lt.s32.totalorder %s967, 63
      %s969 = scalar_select %p968, %s967, 63
      %s970 = smul.addr %s969, 8
      %s971 = scalar_lea.vmem %s2, %s970
      %p972 = scmp.lt.s32.totalorder %s19, 1
      %s973 = scalar_select %p972, %s19, 1
      %s974 = smul.addr %s973, 2
      %s975 = scalar_lea.vmem %s3, %s974
      // Predicated region
      $region37: #{residual_forward.4} parent=27 // pred_check
        %p976 = pneg %p99
      $region38: #{residual_forward.4} parent=27 // pred_check_branch
        %978 = sbr.rel (%p976) target = $region40
      $region39: #{residual_forward.4} parent=27 // pred_region
        %s979 = smul.u32 32, %s19
      $region40: #{residual_forward.4} parent=27 // pred_fallthru
        _
      // Predicated region
      $region41: #{residual_forward.4} parent=27 // pred_check
        %p980 = pneg %p125
      $region42: #{residual_forward.4} parent=27 // pred_check_branch
        %982 = sbr.rel (%p980) target = $region44
      $region43: #{residual_forward.4} parent=27 // pred_region
        _
      $region44: #{residual_forward.4} parent=27 // pred_fallthru
        _
    $region28: #{residual_forward.4} parent=5 // pred_fallthru
      _
    %p983 = scmp.le.s32.totalorder 2, %s10
    // Predicated region
    $region45: #{residual_forward.4} parent=5 // pred_check
      %p984 = pneg %p983
    $region46: #{residual_forward.4} parent=5 // pred_check_branch
      %986 = sbr.rel (%p984) target = $region48
    $region47: #{residual_forward.4} parent=5 // pred_region
      %s987 = ssub.s32 %s10, 2
      // Predicated region
      $region49: #{residual_forward.4} parent=47 // pred_check
        %p988 = pneg %p105
      $region50: #{residual_forward.4} parent=47 // pred_check_branch
        %990 = sbr.rel (%p988) target = $region52
      $region51: #{residual_forward.4} parent=47 // pred_region
        %s991 = smul.u32 32, %s21
        %p992 = scmp.lt.s32.totalorder %s991, 63
        %s993 = scalar_select %p992, %s991, 63
        %s994 = smul.addr %s993, 8
        %s995 = scalar_lea.vmem %s2, %s994
      $region52: #{residual_forward.4} parent=47 // pred_fallthru
        _
      // Predicated region
      $region53: #{residual_forward.4} parent=47 // pred_check
        %p996 = pneg %p131
      $region54: #{residual_forward.4} parent=47 // pred_check_branch
        %998 = sbr.rel (%p996) target = $region56
      $region55: #{residual_forward.4} parent=47 // pred_region
        %p999 = scmp.lt.s32.totalorder %s21, 1
        %s1000 = scalar_select %p999, %s21, 1
        %s1001 = smul.addr %s1000, 2
        %s1002 = scalar_lea.vmem %s3, %s1001
      $region56: #{residual_forward.4} parent=47 // pred_fallthru
        _
    $region48: #{residual_forward.4} parent=5 // pred_fallthru
      _
  $region6: #{residual_forward.4} parent=0 // loop_footer
    %s14 = sadd.s32 1, %s10
  $region7: #{residual_forward.4} parent=0 // loop_footer_branch
    %9 = sbr.rel target = $region3
  $region8: #{residual_forward.4} parent=0 // loop_exit
    _

// kernel: residual_forward.5
$region0: #{residual_forward.5}
  #allocation0 [shape = 'u32[]', space=smem, size = 0x4, offset = 0x4, fixed_abs, tag = 'smem constant byte address 0x4 - core index']
  #allocation1 [shape = 'u32[144,128]{1,0:T(1,128)}', space=vmem, size = 0x12000, scoped, tag = 'internal scratch']
  %s0 = inlined_call_operand.vmem [shape: f32[16,128], index: 0, kind: input, shape index: {}]
  %s1 = inlined_call_operand.vmem [shape: f32[1,128], index: 1, kind: input, shape index: {}]
  %s2 = inlined_call_operand.vmem [shape: f32[1,128], index: 2, kind: input, shape index: {}]
  %s3 = inlined_call_operand.vmem [shape: f32[16,128], index: 3, kind: output, shape index: {}]
  %s4 = sld [smem:[#allocation0]]
  $region22: #{residual_forward.5} parent=0
    _
  %s6 = ssub.s32 1, %s4
  %s7 = scalar_select 0, %s6, %s4
  // Predicated region
  $region2: #{residual_forward.5} parent=0 // pred_check
    _
  $region3: #{residual_forward.5} parent=0 // pred_check_branch
    %9 = sbr.rel (0) target = $region5
  $region4: #{residual_forward.5} parent=0 // pred_region
    _
  $region5: #{residual_forward.5} parent=0 // pred_fallthru
    _
  // Predicated region
  $region6: #{residual_forward.5} parent=0 // pred_check
    _
  $region7: #{residual_forward.5} parent=0 // pred_check_branch
    %11 = sbr.rel (0) target = $region9
  $region8: #{residual_forward.5} parent=0 // pred_region
    _
  $region9: #{residual_forward.5} parent=0 // pred_fallthru
    _
  // Predicated region
  $region10: #{residual_forward.5} parent=0 // pred_check
    _
  $region11: #{residual_forward.5} parent=0 // pred_check_branch
    %13 = sbr.rel (0) target = $region13
  $region12: #{residual_forward.5} parent=0 // pred_region
    _
  $region13: #{residual_forward.5} parent=0 // pred_fallthru
    _
  %v14 = vld [vmem:[%s0] sm:$0xff]
  %v15 = vld [vmem:[%s0 + $0x8] sm:$0xff]
  %v16 = vld [vmem:[%s1] sm:$0x1]
  %v18 = vlaneseq
  %v19 = vshrl.u32 %v18, 7
  %v20 = vsub.s32 0, %v19
  %v21 = vrot.slane %v16, %v20
  %v23 = vmul.f32 %v14, %v21
  %v24 = vmul.f32 %v15, %v21
  %v25 = vld [vmem:[%s2] sm:$0x1]
  %v27 = vlaneseq
  %v28 = vshrl.u32 %v27, 7
  %v29 = vsub.s32 0, %v28
  %v30 = vrot.slane %v25, %v29
  %v32 = vadd.f32 %v23, %v30
  %v33 = vadd.f32 %v24, %v30
  %v34 = vmax.f32 %v32, 0.0
  %v35 = vmax.f32 %v33, 0.0
  %36 = vst [vmem:[%s3] sm:$0xff] %v34
  %37 = vst [vmem:[%s3 + $0x8] sm:$0xff] %v35
  // Predicated region
  $region14: #{residual_forward.5} parent=0 // pred_check
    _
  $region15: #{residual_forward.5} parent=0 // pred_check_branch
    %39 = sbr.rel (0) target = $region17
  $region16: #{residual_forward.5} parent=0 // pred_region
    _
  $region17: #{residual_forward.5} parent=0 // pred_fallthru
    _
  // Predicated region
  $region18: #{residual_forward.5} parent=0 // pred_check
    _
  $region19: #{residual_forward.5} parent=0 // pred_check_branch
    %41 = sbr.rel (0) target = $region21
  $region20: #{residual_forward.5} parent=0 // pred_region
    _
  $region21: #{residual_forward.5} parent=0 // pred_fallthru
    _

// kernel: residual_forward.7
$region0: #{residual_forward.7}
  #allocation0 [shape = 'u32[]', space=smem, size = 0x4, offset = 0x4, fixed_abs, tag = 'smem constant byte address 0x4 - core index']
  #allocation1 [shape = 'u32[144,128]{1,0:T(1,128)}', space=vmem, size = 0x12000, scoped, tag = 'internal scratch']
  %s0 = inlined_call_operand.vmem [shape: f32[16,128], index: 0, kind: input, shape index: {}]
  %s1 = inlined_call_operand.vmem [shape: f32[16,128], index: 1, kind: input, shape index: {}]
  %s2 = inlined_call_operand.vmem [shape: f32[1,128], index: 2, kind: input, shape index: {}]
  %s3 = inlined_call_operand.vmem [shape: f32[1,128], index: 3, kind: input, shape index: {}]
  %s4 = inlined_call_operand.vmem [shape: f32[16,128], index: 4, kind: output, shape index: {}]
  %s5 = sld [smem:[#allocation0]]
  $region26: #{residual_forward.7} parent=0
    _
  %s7 = ssub.s32 1, %s5
  %s8 = scalar_select 0, %s7, %s5
  // Predicated region
  $region2: #{residual_forward.7} parent=0 // pred_check
    _
  $region3: #{residual_forward.7} parent=0 // pred_check_branch
    %10 = sbr.rel (0) target = $region5
  $region4: #{residual_forward.7} parent=0 // pred_region
    _
  $region5: #{residual_forward.7} parent=0 // pred_fallthru
    _
  // Predicated region
  $region6: #{residual_forward.7} parent=0 // pred_check
    _
  $region7: #{residual_forward.7} parent=0 // pred_check_branch
    %12 = sbr.rel (0) target = $region9
  $region8: #{residual_forward.7} parent=0 // pred_region
    _
  $region9: #{residual_forward.7} parent=0 // pred_fallthru
    _
  // Predicated region
  $region10: #{residual_forward.7} parent=0 // pred_check
    _
  $region11: #{residual_forward.7} parent=0 // pred_check_branch
    %14 = sbr.rel (0) target = $region13
  $region12: #{residual_forward.7} parent=0 // pred_region
    _
  $region13: #{residual_forward.7} parent=0 // pred_fallthru
    _
  // Predicated region
  $region14: #{residual_forward.7} parent=0 // pred_check
    _
  $region15: #{residual_forward.7} parent=0 // pred_check_branch
    %16 = sbr.rel (0) target = $region17
  $region16: #{residual_forward.7} parent=0 // pred_region
    _
  $region17: #{residual_forward.7} parent=0 // pred_fallthru
    _
  %v17 = vld [vmem:[%s0] sm:$0xff]
  %v18 = vld [vmem:[%s0 + $0x8] sm:$0xff]
  %v19 = vld [vmem:[%s2] sm:$0x1]
  %v21 = vlaneseq
  %v22 = vshrl.u32 %v21, 7
  %v23 = vsub.s32 0, %v22
  %v24 = vrot.slane %v19, %v23
  %v26 = vmul.f32 %v17, %v24
  %v27 = vmul.f32 %v18, %v24
  %v28 = vld [vmem:[%s3] sm:$0x1]
  %v30 = vlaneseq
  %v31 = vshrl.u32 %v30, 7
  %v32 = vsub.s32 0, %v31
  %v33 = vrot.slane %v28, %v32
  %v35 = vadd.f32 %v26, %v33
  %v36 = vadd.f32 %v27, %v33
  %v37 = vld [vmem:[%s1] sm:$0xff]
  %v38 = vld [vmem:[%s1 + $0x8] sm:$0xff]
  %v39 = vadd.f32 %v35, %v37
  %v40 = vadd.f32 %v36, %v38
  %v41 = vmax.f32 %v39, 0.0
  %v42 = vmax.f32 %v40, 0.0
  %43 = vst [vmem:[%s4] sm:$0xff] %v41
  %44 = vst [vmem:[%s4 + $0x8] sm:$0xff] %v42
  // Predicated region
  $region18: #{residual_forward.7} parent=0 // pred_check
    _
  $region19: #{residual_forward.7} parent=0 // pred_check_branch
    %46 = sbr.rel (0) target = $region21
  $region20: #{residual_forward.7} parent=0 // pred_region
    _
  $region21: #{residual_forward.7} parent=0 // pred_fallthru
    _
  // Predicated region
  $region22: #{residual_forward.7} parent=0 // pred_check
    _
  $region23: #{residual_forward.7} parent=0 // pred_check_branch
    %48 = sbr.rel (0) target = $region25
  $region24: #{residual_forward.7} parent=0 // pred_region
    _
  $region25: #{residual_forward.7} parent=0 // pred_fallthru
    _

</llo_original>
